<compile_context>
chip_gen: v5e
topology: v5e:2x2
jax: 0.10.0
libtpu: 0.0.40
codegen_flags: <defaults>
</compile_context>

<pallas_src>
import functools
import math

import jax
import jax.numpy as jnp
from jax.experimental import pallas as pl
from jax.experimental.pallas import tpu as pltpu

HIDDEN = 40
LAYER_SIZES = [(2, HIDDEN), (HIDDEN, HIDDEN), (HIDDEN, HIDDEN),
               (HIDDEN, HIDDEN), (HIDDEN, HIDDEN), (HIDDEN, 3)]
N_LAYERS = len(LAYER_SIZES)
PAD = 128      # fused feature width: eq lanes 0:40, Neq lanes 40:80, zero pad
N_OUT = 6      # valid output lanes: (rho,u,v) in 0:3, (n1,n2,n3) in 3:6


def _round_up(n, m):
    return ((n + m - 1) // m) * m


def _supports_bf16_eup():
    """bf16 tanh on the EUP is only a win (and native) on v6e / v7x."""
    try:
        kind = jax.devices()[0].device_kind.lower()
    except Exception:
        return False
    return any(tag in kind for tag in ("v6", "v7", "7x"))


def _dnn_kernel(xy_ref, w0_ref, w_ref, b_ref, out_ref, *,
                matmul_dtype, tanh_dtype):
    """One batch tile of the fused eq+Neq MLP.

    xy_ref : (TILE, 2)   f32 input coordinates (x in col 0, y in col 1)
    w0_ref : (8, 128)    f32 layer-0 weight rows (rows 0:2 valid)
    w_ref  : (5, 128, 128) fused block-diagonal weights, layers 1..5
    b_ref  : (6, 1, 128) f32 fused biases, layers 0..5
    out_ref: (TILE, 128) f32 lane-dense output (cols 0:6 valid)
    """
    xy = xy_ref[...]                           # (TILE, 2)
    xcol = xy[:, 0:1]
    ycol = xy[:, 1:2]

    def act(z):
        # z is f32.  Produce the next layer's MXU operand directly (one cast
        # per layer); on v6e/v7x tanh itself runs at the EUP's bf16 rate.
        if tanh_dtype == matmul_dtype:
            return jnp.tanh(z.astype(tanh_dtype))
        return jnp.tanh(z).astype(matmul_dtype)

    # Layer 0 on the VPU: fan_in == 2, so two broadcast FMAs beat a K=2 MXU
    # matmul.  Only the two valid f32 weight rows are touched (no full
    # 128x128 load/convert).
    z0 = xcol * w0_ref[0:1, :] + ycol * w0_ref[1:2, :] + b_ref[0]  # (TILE,128)
    h = act(z0)

    # Hidden layers on the MXU (bf16 operands by default, f32 accumulation,
    # f32 bias add).
    for li in range(1, N_LAYERS - 1):
        z = jnp.dot(h, w_ref[li - 1],
                    preferred_element_type=jnp.float32) + b_ref[li]
        h = act(z)

    # Output layer (no tanh).  Lane-dense full-width store; lanes 6:128 are
    # exactly zero (zero weight columns + zero bias).  Column slicing to
    # (rho,u,v,n1,n2,n3) happens in the XLA wrapper.
    out = jnp.dot(h, w_ref[N_LAYERS - 2],
                  preferred_element_type=jnp.float32) + b_ref[N_LAYERS - 1]
    out_ref[...] = out


def _pack_params(params_eq, params_neq, matmul_dtype):
    """Fuse the two 40-wide nets into one 128-lane block-diagonal stack.

    Returns:
      w0       (8, 128)      f32     layer-0 weight rows (rows 0:2 valid)
      w_hidden (5, 128, 128) matmul_dtype  layers 1..5 (block diagonal)
      b_packed (6, 1, 128)   f32     all biases
    Padding lanes have zero weights and biases, so tanh(0)=0 keeps them inert
    through every layer (no cross-talk between the two nets).
    """
    w0 = jnp.zeros((8, PAD), jnp.float32)
    Ws, Bs = [], []
    for li, (fin, fout) in enumerate(LAYER_SIZES):
        We, be = params_eq[2 * li], params_eq[2 * li + 1]
        Wn, bn = params_neq[2 * li], params_neq[2 * li + 1]
        B = jnp.zeros((1, PAD), jnp.float32)
        if li == 0:
            # Both nets read the same two input rows; kept in f32 separately.
            w0 = w0.at[:fin, :fout].set(We)
            w0 = w0.at[:fin, HIDDEN:HIDDEN + fout].set(Wn)
            B = B.at[:, :fout].set(be)
            B = B.at[:, HIDDEN:HIDDEN + fout].set(bn)
        else:
            W = jnp.zeros((PAD, PAD), jnp.float32)
            if li < N_LAYERS - 1:
                # Block-diagonal hidden layer.
                W = W.at[:fin, :fout].set(We)
                W = W.at[HIDDEN:HIDDEN + fin, HIDDEN:HIDDEN + fout].set(Wn)
                B = B.at[:, :fout].set(be)
                B = B.at[:, HIDDEN:HIDDEN + fout].set(bn)
            else:
                # Final layer: eq -> output lanes 0:3, Neq -> lanes 3:6.
                W = W.at[:fin, :fout].set(We)
                W = W.at[HIDDEN:HIDDEN + fin, fout:2 * fout].set(Wn)
                B = B.at[:, :fout].set(be)
                B = B.at[:, fout:2 * fout].set(bn)
            Ws.append(W)
        Bs.append(B)
    w_hidden = jnp.stack(Ws).astype(matmul_dtype)   # (5, 128, 128)
    b_packed = jnp.stack(Bs)                        # (6, 1, 128) f32
    return w0, w_hidden, b_packed


def dnn_forward(x, y, params_eq, params_neq, *, tile=None,
                matmul_dtype=jnp.bfloat16, tanh_dtype=None):
    """Pallas implementation of DNN.forward(x, y).

    x, y: (N, 1).  Returns (rho, u, v, n1, n2, n3), each (N, 1) float32.

    tile: batch rows per grid step (multiple of 8).  Default: up to 2048,
      auto-chosen so there are >= 2 grid steps when possible (megacore).
    matmul_dtype: jnp.bfloat16 (default) uses the MXU natively on all three
      generations (~3x fewer MXU passes than f32); use jnp.float32 for a
      bit-faithful match to the reference (< 1e-4).
    tanh_dtype: dtype the tanh runs in; defaults to bf16 on v6e/v7x when
      matmul_dtype is bf16, else f32 (v5e has no bf16 EUP).
    """
    matmul_dtype = jnp.dtype(matmul_dtype)
    if tanh_dtype is None:
        if matmul_dtype != jnp.dtype(jnp.float32) and _supports_bf16_eup():
            tanh_dtype = matmul_dtype
        else:
            tanh_dtype = jnp.dtype(jnp.float32)
    else:
        tanh_dtype = jnp.dtype(tanh_dtype)

    x = x.astype(jnp.float32)
    y = y.astype(jnp.float32)
    N = x.shape[0]

    if tile is None:
        # Amortize the ~0.35us per-step overhead; keep >= 2 steps when we can.
        tile = 2048 if N > 4096 else max(8, _round_up(pl.cdiv(N, 2), 8))
    assert tile % 8 == 0

    # Pad the batch so the grid covers it exactly; padded rows are discarded.
    n_tiles = max(int(pl.cdiv(N, tile)), 1)
    Np = n_tiles * tile
    xy = jnp.concatenate([x, y], axis=1)           # single (N, 2) input
    if Np != N:
        xy = jnp.pad(xy, ((0, Np - N), (0, 0)))

    w0, w_hidden, b_packed = _pack_params(params_eq, params_neq, matmul_dtype)

    cost = pl.CostEstimate(
        flops=int(Np * (2 * 2 * PAD + (N_LAYERS - 1) * 2 * PAD * PAD)),
        transcendentals=int(Np * (N_LAYERS - 1) * PAD),
        bytes_accessed=int(Np * (2 + PAD) * 4
                           + w0.size * 4
                           + w_hidden.size * w_hidden.dtype.itemsize
                           + b_packed.size * 4),
    )

    out = pl.pallas_call(
        functools.partial(_dnn_kernel, matmul_dtype=matmul_dtype,
                          tanh_dtype=tanh_dtype),
        grid=(n_tiles,),
        in_specs=[
            pl.BlockSpec((tile, 2), lambda i: (i, 0)),             # xy
            # Constant index_map -> each parameter stack is DMA'd once.
            pl.BlockSpec((8, PAD), lambda i: (0, 0)),              # layer-0 W
            pl.BlockSpec((N_LAYERS - 1, PAD, PAD), lambda i: (0, 0, 0)),
            pl.BlockSpec((N_LAYERS, 1, PAD), lambda i: (0, 0, 0)),
        ],
        # Lane-dense 128-wide output block (unmasked stores); slice in XLA.
        out_specs=pl.BlockSpec((tile, PAD), lambda i: (i, 0)),
        out_shape=jax.ShapeDtypeStruct((Np, PAD), jnp.float32),
        compiler_params=pltpu.CompilerParams(
            dimension_semantics=("parallel",)),
        cost_estimate=cost,
    )(xy, w0, w_hidden, b_packed)

    out = out[:N, :N_OUT]
    rho, u, v = out[:, 0:1], out[:, 1:2], out[:, 2:3]
    n1, n2, n3 = out[:, 3:4], out[:, 4:5], out[:, 5:6]
    return rho, u, v, n1, n2, n3


def init_net(key):
    """Deterministic init mirroring the PyTorch module:
    layer 0: xavier_normal_ weight + zero bias; other layers: PyTorch default
    uniform(-1/sqrt(fan_in), 1/sqrt(fan_in)).  Weights stored as (in, out)."""
    params = []
    for i, (fin, fout) in enumerate(LAYER_SIZES):
        key, kw, kb = jax.random.split(key, 3)
        if i == 0:
            std = math.sqrt(2.0 / (fin + fout))
            W = std * jax.random.normal(kw, (fin, fout), jnp.float32)
            b = jnp.zeros((1, fout), jnp.float32)
        else:
            bound = 1.0 / math.sqrt(fin)
            W = jax.random.uniform(kw, (fin, fout), jnp.float32, -bound, bound)
            b = jax.random.uniform(kb, (1, fout), jnp.float32, -bound, bound)
        params += [W, b]
    return key, params


def reference_forward(x, y, params_eq, params_neq):
    """Pure-JAX f32 reference of the same math for a sanity check."""
    h_in = jnp.concatenate([x, y], axis=1)

    def run(h, prms):
        for li in range(N_LAYERS):
            h = h @ prms[2 * li] + prms[2 * li + 1]
            if li < N_LAYERS - 1:
                h = jnp.tanh(h)
        return h

    oe = run(h_in, params_eq)
    on = run(h_in, params_neq)
    return (oe[:, 0:1], oe[:, 1:2], oe[:, 2:3],
            on[:, 0:1], on[:, 1:2], on[:, 2:3])


if __name__ == "__main__":
    key = jax.random.PRNGKey(0)
    key, params_eq = init_net(key)
    key, params_neq = init_net(key)

    # Non-multiple batch exercises the padded tail; the auto tile gives a
    # 2-step grid so both v7x TensorCores are fed.
    N = 1000
    key, kx, ky = jax.random.split(key, 3)
    x = jax.random.uniform(kx, (N, 1), jnp.float32)
    y = jax.random.uniform(ky, (N, 1), jnp.float32)

    refs = reference_forward(x, y, params_eq, params_neq)

    # 1) float32 path: bit-faithful to the module semantics (tight tolerance).
    outs_f32 = dnn_forward(x, y, params_eq, params_neq,
                           matmul_dtype=jnp.float32, tile=512)
    outs_f32 = jax.block_until_ready(outs_f32)
    for o, r in zip(outs_f32, refs):
        assert o.shape == (N, 1)
        assert float(jnp.max(jnp.abs(o - r))) < 1e-4

    # 2) default performance path (bf16 MXU operands, f32 accumulation).
    outs_bf16 = dnn_forward(x, y, params_eq, params_neq)
    outs_bf16 = jax.block_until_ready(outs_bf16)
    for o, r in zip(outs_bf16, refs):
        assert o.shape == (N, 1)
        assert float(jnp.max(jnp.abs(o - r))) < 5e-2

    print("KERNEL_OK")
</pallas_src>

<mosaic_0001>
module attributes {stable_mosaic.version = 11 : i64} {
  func.func @_dnn_kernel(%arg0: i32, %arg1: memref<512x2xf32, #tpu.memory_space<vmem>>, %arg2: memref<8x128xf32, #tpu.memory_space<vmem>>, %arg3: memref<5x128x128xf32, #tpu.memory_space<vmem>>, %arg4: memref<6x1x128xf32, #tpu.memory_space<vmem>>, %arg5: memref<512x128xf32, #tpu.memory_space<vmem>>) attributes {dimension_semantics = [#tpu.dimension_semantics<parallel>], iteration_bounds = array<i64: 2>, scalar_prefetch = 0 : i64, scratch_operands = 0 : i64, tpu.core_type = #tpu.core_type<tc>, window_params = [{transform_indices = @transform_0, window_bounds = array<i64: 512, 2>}, {pipeline_mode = #tpu.pipeline_mode<synchronous>, transform_indices = @transform_1, window_bounds = array<i64: 8, 128>}, {pipeline_mode = #tpu.pipeline_mode<synchronous>, transform_indices = @transform_2, window_bounds = array<i64: 5, 128, 128>}, {pipeline_mode = #tpu.pipeline_mode<synchronous>, transform_indices = @transform_3, window_bounds = array<i64: 6, 1, 128>}, {transform_indices = @transform_4, window_bounds = array<i64: 512, 128>}]} {
    %c0 = arith.constant 0 : index
    %c0_0 = arith.constant 0 : index
    %0 = vector.load %arg1[%c0, %c0_0] : memref<512x2xf32, #tpu.memory_space<vmem>>, vector<512x2xf32>
    %1 = vector.extract_strided_slice %0 {offsets = [0, 0], sizes = [512, 1], strides = [1, 1]} : vector<512x2xf32> to vector<512x1xf32>
    %2 = vector.extract_strided_slice %0 {offsets = [0, 1], sizes = [512, 1], strides = [1, 1]} : vector<512x2xf32> to vector<512x1xf32>
    %c0_1 = arith.constant 0 : index
    %c0_2 = arith.constant 0 : index
    %3 = vector.load %arg2[%c0_1, %c0_2] : memref<8x128xf32, #tpu.memory_space<vmem>>, vector<1x128xf32>
    %4 = vector.broadcast %1 : vector<512x1xf32> to vector<512x128xf32>
    %5 = vector.broadcast %3 : vector<1x128xf32> to vector<512x128xf32>
    %6 = arith.mulf %4, %5 : vector<512x128xf32>
    %c1 = arith.constant 1 : index
    %c0_3 = arith.constant 0 : index
    %7 = vector.load %arg2[%c1, %c0_3] : memref<8x128xf32, #tpu.memory_space<vmem>>, vector<1x128xf32>
    %8 = vector.broadcast %2 : vector<512x1xf32> to vector<512x128xf32>
    %9 = vector.broadcast %7 : vector<1x128xf32> to vector<512x128xf32>
    %10 = arith.mulf %8, %9 : vector<512x128xf32>
    %11 = arith.addf %6, %10 : vector<512x128xf32>
    %c0_4 = arith.constant 0 : index
    %c0_5 = arith.constant 0 : index
    %c0_6 = arith.constant 0 : index
    %12 = vector.load %arg4[%c0_4, %c0_5, %c0_6] : memref<6x1x128xf32, #tpu.memory_space<vmem>>, vector<1x1x128xf32>
    %13 = vector.shape_cast %12 : vector<1x1x128xf32> to vector<1x128xf32>
    %14 = vector.broadcast %13 : vector<1x128xf32> to vector<512x128xf32>
    %15 = arith.addf %11, %14 : vector<512x128xf32>
    %16 = math.tanh %15 : vector<512x128xf32>
    %c0_7 = arith.constant 0 : index
    %c0_8 = arith.constant 0 : index
    %c0_9 = arith.constant 0 : index
    %17 = vector.load %arg3[%c0_7, %c0_8, %c0_9] : memref<5x128x128xf32, #tpu.memory_space<vmem>>, vector<1x128x128xf32>
    %18 = vector.shape_cast %17 : vector<1x128x128xf32> to vector<128x128xf32>
    %cst = arith.constant dense<0.000000e+00> : vector<512x128xf32>
    %19 = tpu.matmul %16, %18, %cst {dimension_numbers = #tpu.dot_dimension_numbers<[1], [0], [0], [1], [0, 0, 1, 1], [], []>} : vector<512x128xf32>, vector<128x128xf32>, vector<512x128xf32> -> vector<512x128xf32>
    %c1_10 = arith.constant 1 : index
    %c0_11 = arith.constant 0 : index
    %c0_12 = arith.constant 0 : index
    %20 = vector.load %arg4[%c1_10, %c0_11, %c0_12] : memref<6x1x128xf32, #tpu.memory_space<vmem>>, vector<1x1x128xf32>
    %21 = vector.shape_cast %20 : vector<1x1x128xf32> to vector<1x128xf32>
    %22 = vector.broadcast %21 : vector<1x128xf32> to vector<512x128xf32>
    %23 = arith.addf %19, %22 : vector<512x128xf32>
    %24 = math.tanh %23 : vector<512x128xf32>
    %c1_13 = arith.constant 1 : index
    %c0_14 = arith.constant 0 : index
    %c0_15 = arith.constant 0 : index
    %25 = vector.load %arg3[%c1_13, %c0_14, %c0_15] : memref<5x128x128xf32, #tpu.memory_space<vmem>>, vector<1x128x128xf32>
    %26 = vector.shape_cast %25 : vector<1x128x128xf32> to vector<128x128xf32>
    %cst_16 = arith.constant dense<0.000000e+00> : vector<512x128xf32>
    %27 = tpu.matmul %24, %26, %cst_16 {dimension_numbers = #tpu.dot_dimension_numbers<[1], [0], [0], [1], [0, 0, 1, 1], [], []>} : vector<512x128xf32>, vector<128x128xf32>, vector<512x128xf32> -> vector<512x128xf32>
    %c2 = arith.constant 2 : index
    %c0_17 = arith.constant 0 : index
    %c0_18 = arith.constant 0 : index
    %28 = vector.load %arg4[%c2, %c0_17, %c0_18] : memref<6x1x128xf32, #tpu.memory_space<vmem>>, vector<1x1x128xf32>
    %29 = vector.shape_cast %28 : vector<1x1x128xf32> to vector<1x128xf32>
    %30 = vector.broadcast %29 : vector<1x128xf32> to vector<512x128xf32>
    %31 = arith.addf %27, %30 : vector<512x128xf32>
    %32 = math.tanh %31 : vector<512x128xf32>
    %c2_19 = arith.constant 2 : index
    %c0_20 = arith.constant 0 : index
    %c0_21 = arith.constant 0 : index
    %33 = vector.load %arg3[%c2_19, %c0_20, %c0_21] : memref<5x128x128xf32, #tpu.memory_space<vmem>>, vector<1x128x128xf32>
    %34 = vector.shape_cast %33 : vector<1x128x128xf32> to vector<128x128xf32>
    %cst_22 = arith.constant dense<0.000000e+00> : vector<512x128xf32>
    %35 = tpu.matmul %32, %34, %cst_22 {dimension_numbers = #tpu.dot_dimension_numbers<[1], [0], [0], [1], [0, 0, 1, 1], [], []>} : vector<512x128xf32>, vector<128x128xf32>, vector<512x128xf32> -> vector<512x128xf32>
    %c3 = arith.constant 3 : index
    %c0_23 = arith.constant 0 : index
    %c0_24 = arith.constant 0 : index
    %36 = vector.load %arg4[%c3, %c0_23, %c0_24] : memref<6x1x128xf32, #tpu.memory_space<vmem>>, vector<1x1x128xf32>
    %37 = vector.shape_cast %36 : vector<1x1x128xf32> to vector<1x128xf32>
    %38 = vector.broadcast %37 : vector<1x128xf32> to vector<512x128xf32>
    %39 = arith.addf %35, %38 : vector<512x128xf32>
    %40 = math.tanh %39 : vector<512x128xf32>
    %c3_25 = arith.constant 3 : index
    %c0_26 = arith.constant 0 : index
    %c0_27 = arith.constant 0 : index
    %41 = vector.load %arg3[%c3_25, %c0_26, %c0_27] : memref<5x128x128xf32, #tpu.memory_space<vmem>>, vector<1x128x128xf32>
    %42 = vector.shape_cast %41 : vector<1x128x128xf32> to vector<128x128xf32>
    %cst_28 = arith.constant dense<0.000000e+00> : vector<512x128xf32>
    %43 = tpu.matmul %40, %42, %cst_28 {dimension_numbers = #tpu.dot_dimension_numbers<[1], [0], [0], [1], [0, 0, 1, 1], [], []>} : vector<512x128xf32>, vector<128x128xf32>, vector<512x128xf32> -> vector<512x128xf32>
    %c4 = arith.constant 4 : index
    %c0_29 = arith.constant 0 : index
    %c0_30 = arith.constant 0 : index
    %44 = vector.load %arg4[%c4, %c0_29, %c0_30] : memref<6x1x128xf32, #tpu.memory_space<vmem>>, vector<1x1x128xf32>
    %45 = vector.shape_cast %44 : vector<1x1x128xf32> to vector<1x128xf32>
    %46 = vector.broadcast %45 : vector<1x128xf32> to vector<512x128xf32>
    %47 = arith.addf %43, %46 : vector<512x128xf32>
    %48 = math.tanh %47 : vector<512x128xf32>
    %c4_31 = arith.constant 4 : index
    %c0_32 = arith.constant 0 : index
    %c0_33 = arith.constant 0 : index
    %49 = vector.load %arg3[%c4_31, %c0_32, %c0_33] : memref<5x128x128xf32, #tpu.memory_space<vmem>>, vector<1x128x128xf32>
    %50 = vector.shape_cast %49 : vector<1x128x128xf32> to vector<128x128xf32>
    %cst_34 = arith.constant dense<0.000000e+00> : vector<512x128xf32>
    %51 = tpu.matmul %48, %50, %cst_34 {dimension_numbers = #tpu.dot_dimension_numbers<[1], [0], [0], [1], [0, 0, 1, 1], [], []>} : vector<512x128xf32>, vector<128x128xf32>, vector<512x128xf32> -> vector<512x128xf32>
    %c5 = arith.constant 5 : index
    %c0_35 = arith.constant 0 : index
    %c0_36 = arith.constant 0 : index
    %52 = vector.load %arg4[%c5, %c0_35, %c0_36] : memref<6x1x128xf32, #tpu.memory_space<vmem>>, vector<1x1x128xf32>
    %53 = vector.shape_cast %52 : vector<1x1x128xf32> to vector<1x128xf32>
    %54 = vector.broadcast %53 : vector<1x128xf32> to vector<512x128xf32>
    %55 = arith.addf %51, %54 : vector<512x128xf32>
    %c0_37 = arith.constant 0 : index
    %c0_38 = arith.constant 0 : index
    %56 = vector.load %arg5[%c0_37, %c0_38] : memref<512x128xf32, #tpu.memory_space<vmem>>, vector<512x128xf32>
    tpu.vector_store %arg5[%c0_37, %c0_38], %55 {strides = array<i32>} : memref<512x128xf32, #tpu.memory_space<vmem>>, vector<512x128xf32>,
    return
  }
  func.func @transform_0(%arg0: i32) -> (i32, i32) {
    %c0_i32 = arith.constant 0 : i32
    %c0_i32_0 = arith.constant 0 : i32
    return %arg0, %c0_i32 : i32, i32
  }
  func.func @transform_1(%arg0: i32) -> (i32, i32) {
    %c0_i32 = arith.constant 0 : i32
    %c0_i32_0 = arith.constant 0 : i32
    %c0_i32_1 = arith.constant 0 : i32
    return %c0_i32, %c0_i32_0 : i32, i32
  }
  func.func @transform_2(%arg0: i32) -> (i32, i32, i32) {
    %c0_i32 = arith.constant 0 : i32
    %c0_i32_0 = arith.constant 0 : i32
    %c0_i32_1 = arith.constant 0 : i32
    %c0_i32_2 = arith.constant 0 : i32
    return %c0_i32, %c0_i32_0, %c0_i32_1 : i32, i32, i32
  }
  func.func @transform_3(%arg0: i32) -> (i32, i32, i32) {
    %c0_i32 = arith.constant 0 : i32
    %c0_i32_0 = arith.constant 0 : i32
    %c0_i32_1 = arith.constant 0 : i32
    %c0_i32_2 = arith.constant 0 : i32
    return %c0_i32, %c0_i32_0, %c0_i32_1 : i32, i32, i32
  }
  func.func @transform_4(%arg0: i32) -> (i32, i32) {
    %c0_i32 = arith.constant 0 : i32
    %c0_i32_0 = arith.constant 0 : i32
    return %arg0, %c0_i32 : i32, i32
  }
}

</mosaic_0001>

<llo_original>
// kernel: tpu_custom_call.1
$region0: #{tpu_custom_call.1}
  #allocation0 [shape = 'u32[]', space=smem, size = 0x4, offset = 0x4, fixed_abs, tag = 'smem constant byte address 0x4 - core index']
  #allocation1 [shape = 'u32[72,128]{1,0:T(1,128)}', space=vmem, size = 0x9000, scoped, tag = 'internal scratch']
  %s0 = inlined_call_operand.vmem [shape: f32[1024,2], index: 0, kind: input, shape index: {}]
  %s1 = inlined_call_operand.vmem [shape: f32[8,128], index: 1, kind: input, shape index: {}]
  %s2 = inlined_call_operand.vmem [shape: f32[5,128,128], index: 2, kind: input, shape index: {}]
  %s3 = inlined_call_operand.vmem [shape: f32[6,1,128], index: 3, kind: input, shape index: {}]
  %s4 = inlined_call_operand.hbm [shape: f32[1024,128], index: 4, kind: output, shape index: {}]
  %s5 = sld [smem:[#allocation0]]
  $region49: #{tpu_custom_call.1} parent=0
    _
  %s7 = ssub.s32 1, %s5
  %s8 = scalar_select 0, %s7, %s5
  $region1: #{tpu_custom_call.1} parent=0
    #allocation2 [shape = 'u8[524288]{0}', space=vmem, size = 0x80000, scoped, tag = 'output window, operand 0']
    #allocation3 [shape = 's32[2]{0}', space=sflag, size = 0x8, scoped, tag = 'scoped memory for tpu_custom_call.1']
    %9 = vsyncpa [#allocation3], 0
    %s10 = scalar_lea.sflag [#allocation3], 1
    %11 = vsyncpa %s10, 0
    loop: start=0, step=1, limit=4
    $region2: #{tpu_custom_call.1} parent=1 // loop_pre_header
      _
    $region3: #{tpu_custom_call.1} parent=1 // loop_header
      %s13 = sphi 0, %s17
      %p14 = scmp.ge.s32.totalorder %s13, 4
      %s23 = sphi 0, %s25
      %s26 = sphi 0, %s23
      %s27 = sphi 0, %s26
      %s43 = sphi 0, %s27
      %s47 = sphi 0, %s47
      %s49 = sphi 0, %s47
      %s50 = sphi 0, %s49
      %s64 = sphi 0, %s50
      %s68 = sphi 0, %s68
      %s70 = sphi 0, %s68
      %s71 = sphi 0, %s70
      %s85 = sphi 0, %s71
      %s89 = sphi 0, %s89
      %s91 = sphi 0, %s89
      %s92 = sphi 0, %s91
      %s106 = sphi 0, %s92
      %s112 = sphi 0, %s114
      %s115 = sphi 0, %s112
      %s116 = sphi 0, %s115
      %s132 = sphi 0, %s116
    $region4: #{tpu_custom_call.1} parent=1 // loop_header_branch
      %16 = sbr.rel (%p14) target = $region8
    $region5: #{tpu_custom_call.1} parent=1 // loop_body
      %s18 = ssub.s32 %s13, 1
      %s19 = ssub.s32 %s13, 2
      %s20 = sadd.s32 %s13, 1
      %s21 = ssub.s32 %s13, %s20
      %p22 = scmp.eq.s32.totalorder %s21, 0
      %s24 = sadd.s32 %s23, 1
      %s25 = scalar_select %p22, %s23, %s24
      %p28 = pneg %p22
      %p29 = scmp.eq.s32.totalorder %s13, 1
      %p30 = por %p28, %p29
      %p31 = scmp.ne.s32.totalorder %s23, %s26
      %p32 = scmp.eq.s32.totalorder %s13, 0
      %p33 = por %p31, %p32
      %p34 = scmp.ne.s32.totalorder %s23, %s26
      %p35 = scmp.eq.s32.totalorder %s18, 1
      %p36 = por %p34, %p35
      %p37 = scmp.ne.s32.totalorder %s26, %s27
      %p38 = scmp.eq.s32.totalorder %s18, 0
      %p39 = por %p37, %p38
      %p40 = scmp.ne.s32.totalorder %s26, %s27
      %p41 = scmp.eq.s32.totalorder %s19, 1
      %p42 = por %p40, %p41
      %p44 = scmp.ne.s32.totalorder %s27, %s43
      %p45 = scmp.eq.s32.totalorder %s19, 0
      %p46 = por %p44, %p45
      %s48 = sadd.s32 %s47, 1
      %p51 = scmp.eq.s32.totalorder %s13, 1
      %p52 = scmp.ne.s32.totalorder %s47, %s49
      %p53 = scmp.eq.s32.totalorder %s13, 0
      %p54 = por %p52, %p53
      %p55 = scmp.ne.s32.totalorder %s47, %s49
      %p56 = scmp.eq.s32.totalorder %s18, 1
      %p57 = por %p55, %p56
      %p58 = scmp.ne.s32.totalorder %s49, %s50
      %p59 = scmp.eq.s32.totalorder %s18, 0
      %p60 = por %p58, %p59
      %p61 = scmp.ne.s32.totalorder %s49, %s50
      %p62 = scmp.eq.s32.totalorder %s19, 1
      %p63 = por %p61, %p62
      %p65 = scmp.ne.s32.totalorder %s50, %s64
      %p66 = scmp.eq.s32.totalorder %s19, 0
      %p67 = por %p65, %p66
      %s69 = sadd.s32 %s68, 1
      %p72 = scmp.eq.s32.totalorder %s13, 1
      %p73 = scmp.ne.s32.totalorder %s68, %s70
      %p74 = scmp.eq.s32.totalorder %s13, 0
      %p75 = por %p73, %p74
      %p76 = scmp.ne.s32.totalorder %s68, %s70
      %p77 = scmp.eq.s32.totalorder %s18, 1
      %p78 = por %p76, %p77
      %p79 = scmp.ne.s32.totalorder %s70, %s71
      %p80 = scmp.eq.s32.totalorder %s18, 0
      %p81 = por %p79, %p80
      %p82 = scmp.ne.s32.totalorder %s70, %s71
      %p83 = scmp.eq.s32.totalorder %s19, 1
      %p84 = por %p82, %p83
      %p86 = scmp.ne.s32.totalorder %s71, %s85
      %p87 = scmp.eq.s32.totalorder %s19, 0
      %p88 = por %p86, %p87
      %s90 = sadd.s32 %s89, 1
      %p93 = scmp.eq.s32.totalorder %s13, 1
      %p94 = scmp.ne.s32.totalorder %s89, %s91
      %p95 = scmp.eq.s32.totalorder %s13, 0
      %p96 = por %p94, %p95
      %p97 = scmp.ne.s32.totalorder %s89, %s91
      %p98 = scmp.eq.s32.totalorder %s18, 1
      %p99 = por %p97, %p98
      %p100 = scmp.ne.s32.totalorder %s91, %s92
      %p101 = scmp.eq.s32.totalorder %s18, 0
      %p102 = por %p100, %p101
      %p103 = scmp.ne.s32.totalorder %s91, %s92
      %p104 = scmp.eq.s32.totalorder %s19, 1
      %p105 = por %p103, %p104
      %p107 = scmp.ne.s32.totalorder %s92, %s106
      %p108 = scmp.eq.s32.totalorder %s19, 0
      %p109 = por %p107, %p108
      %s110 = ssub.s32 %s13, %s20
      %p111 = scmp.eq.s32.totalorder %s110, 0
      %s113 = sadd.s32 %s112, 1
      %s114 = scalar_select %p111, %s112, %s113
      %p117 = pneg %p111
      %p118 = scmp.eq.s32.totalorder %s13, 1
      %p119 = por %p117, %p118
      %p120 = scmp.ne.s32.totalorder %s112, %s115
      %p121 = scmp.eq.s32.totalorder %s13, 0
      %p122 = por %p120, %p121
      %p123 = scmp.ne.s32.totalorder %s112, %s115
      %p124 = scmp.eq.s32.totalorder %s18, 1
      %p125 = por %p123, %p124
      %p126 = scmp.ne.s32.totalorder %s115, %s116
      %p127 = scmp.eq.s32.totalorder %s18, 0
      %p128 = por %p126, %p127
      %p129 = scmp.ne.s32.totalorder %s115, %s116
      %p130 = scmp.eq.s32.totalorder %s19, 1
      %p131 = por %p129, %p130
      %p133 = scmp.ne.s32.totalorder %s116, %s132
      %p134 = scmp.eq.s32.totalorder %s19, 0
      %p135 = por %p133, %p134
      %p136 = scmp.le.s32.totalorder 1, %s13
      %p137 = scmp.lt.s32.totalorder %s13, 3
      %p138 = pnand %p136, %p137
      %p139 = pneg %p138
      // Predicated region
      $region9: #{tpu_custom_call.1} parent=5 // pred_check
        _
      $region10: #{tpu_custom_call.1} parent=5 // pred_check_branch
        %141 = sbr.rel (%p138) target = $region12
      $region11: #{tpu_custom_call.1} parent=5 // pred_region
        %s142 = ssub.s32 %s13, 1
        // Predicated region
        $region13: #{tpu_custom_call.1} parent=11 // pred_check
          %p143 = pneg %p60
        $region14: #{tpu_custom_call.1} parent=11 // pred_check_branch
          %145 = sbr.rel (%p143) target = $region16
        $region15: #{tpu_custom_call.1} parent=11 // pred_region
          _
        $region16: #{tpu_custom_call.1} parent=11 // pred_fallthru
          _
        // Predicated region
        $region17: #{tpu_custom_call.1} parent=11 // pred_check
          %p146 = pneg %p81
        $region18: #{tpu_custom_call.1} parent=11 // pred_check_branch
          %148 = sbr.rel (%p146) target = $region20
        $region19: #{tpu_custom_call.1} parent=11 // pred_region
          _
        $region20: #{tpu_custom_call.1} parent=11 // pred_fallthru
          _
        // Predicated region
        $region21: #{tpu_custom_call.1} parent=11 // pred_check
          %p149 = pneg %p102
        $region22: #{tpu_custom_call.1} parent=11 // pred_check_branch
          %151 = sbr.rel (%p149) target = $region24
        $region23: #{tpu_custom_call.1} parent=11 // pred_region
          _
        $region24: #{tpu_custom_call.1} parent=11 // pred_fallthru
          _
      $region12: #{tpu_custom_call.1} parent=5 // pred_fallthru
        _
      %p152 = scmp.lt.s32.totalorder %s13, 2
      // Predicated region
      $region25: #{tpu_custom_call.1} parent=5 // pred_check
        %p153 = pneg %p152
      $region26: #{tpu_custom_call.1} parent=5 // pred_check_branch
        %155 = sbr.rel (%p153) target = $region28
      $region27: #{tpu_custom_call.1} parent=5 // pred_region
        // Predicated region
        $region29: #{tpu_custom_call.1} parent=27 // pred_check
          %p156 = pneg %p33
        $region30: #{tpu_custom_call.1} parent=27 // pred_check_branch
          %158 = sbr.rel (%p156) target = $region32
        $region31: #{tpu_custom_call.1} parent=27 // pred_region
          %s159 = smul.u32 64, %s13
          %p160 = scmp.lt.s32.totalorder %s159, 127
          %s161 = scalar_select %p160, %s159, 127
          %s162 = smul.addr %s161, 8
          %s163 = scalar_lea.vmem %s0, %s162
          %s164 = smul.u32 64, %s13
        $region32: #{tpu_custom_call.1} parent=27 // pred_fallthru
          _
      $region28: #{tpu_custom_call.1} parent=5 // pred_fallthru
        _
      %p165 = scmp.le.s32.totalorder 1, %s13
      %p166 = scmp.lt.s32.totalorder %s13, 3
      %p167 = pnand %p165, %p166
      %p168 = pneg %p167
      // Predicated region
      $region33: #{tpu_custom_call.1} parent=5 // pred_check
        _
      $region34: #{tpu_custom_call.1} parent=5 // pred_check_branch
        %170 = sbr.rel (%p167) target = $region36
      $region35: #{tpu_custom_call.1} parent=5 // pred_region
        %s171 = ssub.s32 %s13, 1
        %s172 = smul.u32 64, %s18
        %p173 = scmp.lt.s32.totalorder %s172, 127
        %s174 = scalar_select %p173, %s172, 127
        %s175 = smul.addr %s174, 8
        %s176 = scalar_lea.vmem %s0, %s175
        %p177 = pneg %p39
        %p178 = pneg %p36
        %p179 = pneg %p60
        %p180 = pneg %p57
        %p181 = pneg %p81
        %p182 = pneg %p78
        %p183 = pneg %p102
        %p184 = pneg %p99
        %p185 = pneg %p128
        %p186 = pneg %p125
        %s187 = sand.u32 %s115, 1
        %s188 = scalar_lea.sflag [#allocation3], %s187
        %s189 = sand.u32 %s115, 1
        %s190 = smul.addr %s189, 512
        %s191 = scalar_lea.vmem [#allocation2], %s190
        %s192 = smul.u32 64, %s18
        %p193 = scmp.lt.s32.totalorder %s192, 127
        %s194 = scalar_select %p193, %s192, 127
        %s195 = smul.addr %s194, 8
        %s196 = scalar_lea.vmem %s0, %s195
        %s197 = smul.u32 64, %s18
        %s198 = smul.u32 64, %s18
        %v199 = vld [vmem:[%s196] sm:$0xff]
        %v200 = vld [vmem:[%s196 + $0x8] sm:$0xff]
        %v201 = vld [vmem:[%s196 + $0x10] sm:$0xff]
        %v202 = vld [vmem:[%s196 + $0x18] sm:$0xff]
        %v203 = vld [vmem:[%s196 + $0x20] sm:$0xff]
        %v204 = vld [vmem:[%s196 + $0x28] sm:$0xff]
        %v205 = vld [vmem:[%s196 + $0x30] sm:$0xff]
        %v206 = vld [vmem:[%s196 + $0x38] sm:$0xff]
        %v207 = vld [vmem:[%s196 + $0x40] sm:$0xff]
        %v208 = vld [vmem:[%s196 + $0x48] sm:$0xff]
        %v209 = vld [vmem:[%s196 + $0x50] sm:$0xff]
        %v210 = vld [vmem:[%s196 + $0x58] sm:$0xff]
        %v211 = vld [vmem:[%s196 + $0x60] sm:$0xff]
        %v212 = vld [vmem:[%s196 + $0x68] sm:$0xff]
        %v213 = vld [vmem:[%s196 + $0x70] sm:$0xff]
        %v214 = vld [vmem:[%s196 + $0x78] sm:$0xff]
        %v215 = vld [vmem:[%s196 + $0x80] sm:$0xff]
        %v216 = vld [vmem:[%s196 + $0x88] sm:$0xff]
        %v217 = vld [vmem:[%s196 + $0x90] sm:$0xff]
        %v218 = vld [vmem:[%s196 + $0x98] sm:$0xff]
        %v219 = vld [vmem:[%s196 + $0xa0] sm:$0xff]
        %v220 = vld [vmem:[%s196 + $0xa8] sm:$0xff]
        %v221 = vld [vmem:[%s196 + $0xb0] sm:$0xff]
        %v222 = vld [vmem:[%s196 + $0xb8] sm:$0xff]
        %v223 = vld [vmem:[%s196 + $0xc0] sm:$0xff]
        %v224 = vld [vmem:[%s196 + $0xc8] sm:$0xff]
        %v225 = vld [vmem:[%s196 + $0xd0] sm:$0xff]
        %v226 = vld [vmem:[%s196 + $0xd8] sm:$0xff]
        %v227 = vld [vmem:[%s196 + $0xe0] sm:$0xff]
        %v228 = vld [vmem:[%s196 + $0xe8] sm:$0xff]
        %v229 = vld [vmem:[%s196 + $0xf0] sm:$0xff]
        %v230 = vld [vmem:[%s196 + $0xf8] sm:$0xff]
        %v231 = vld [vmem:[%s196 + $0x100] sm:$0xff]
        %v232 = vld [vmem:[%s196 + $0x108] sm:$0xff]
        %v233 = vld [vmem:[%s196 + $0x110] sm:$0xff]
        %v234 = vld [vmem:[%s196 + $0x118] sm:$0xff]
        %v235 = vld [vmem:[%s196 + $0x120] sm:$0xff]
        %v236 = vld [vmem:[%s196 + $0x128] sm:$0xff]
        %v237 = vld [vmem:[%s196 + $0x130] sm:$0xff]
        %v238 = vld [vmem:[%s196 + $0x138] sm:$0xff]
        %v239 = vld [vmem:[%s196 + $0x140] sm:$0xff]
        %v240 = vld [vmem:[%s196 + $0x148] sm:$0xff]
        %v241 = vld [vmem:[%s196 + $0x150] sm:$0xff]
        %v242 = vld [vmem:[%s196 + $0x158] sm:$0xff]
        %v243 = vld [vmem:[%s196 + $0x160] sm:$0xff]
        %v244 = vld [vmem:[%s196 + $0x168] sm:$0xff]
        %v245 = vld [vmem:[%s196 + $0x170] sm:$0xff]
        %v246 = vld [vmem:[%s196 + $0x178] sm:$0xff]
        %v247 = vld [vmem:[%s196 + $0x180] sm:$0xff]
        %v248 = vld [vmem:[%s196 + $0x188] sm:$0xff]
        %v249 = vld [vmem:[%s196 + $0x190] sm:$0xff]
        %v250 = vld [vmem:[%s196 + $0x198] sm:$0xff]
        %v251 = vld [vmem:[%s196 + $0x1a0] sm:$0xff]
        %v252 = vld [vmem:[%s196 + $0x1a8] sm:$0xff]
        %v253 = vld [vmem:[%s196 + $0x1b0] sm:$0xff]
        %v254 = vld [vmem:[%s196 + $0x1b8] sm:$0xff]
        %v255 = vld [vmem:[%s196 + $0x1c0] sm:$0xff]
        %v256 = vld [vmem:[%s196 + $0x1c8] sm:$0xff]
        %v257 = vld [vmem:[%s196 + $0x1d0] sm:$0xff]
        %v258 = vld [vmem:[%s196 + $0x1d8] sm:$0xff]
        %v259 = vld [vmem:[%s196 + $0x1e0] sm:$0xff]
        %v260 = vld [vmem:[%s196 + $0x1e8] sm:$0xff]
        %v261 = vld [vmem:[%s196 + $0x1f0] sm:$0xff]
        %v262 = vld [vmem:[%s196 + $0x1f8] sm:$0xff]
        %v263 = vld [vmem:[%s1] sm:$0x1]
        %265 = vset.pattern.permute.xlu0 0
        %266 = vperm.xlu0 %265, %v199
        %v267 = vpop.permute.xlu0 %266
        %270 = vset.pattern.permute.xlu0 0
        %271 = vperm.xlu0 %270, %v200
        %v272 = vpop.permute.xlu0 %271
        %275 = vset.pattern.permute.xlu0 0
        %276 = vperm.xlu0 %275, %v201
        %v277 = vpop.permute.xlu0 %276
        %280 = vset.pattern.permute.xlu0 0
        %281 = vperm.xlu0 %280, %v202
        %v282 = vpop.permute.xlu0 %281
        %285 = vset.pattern.permute.xlu0 0
        %286 = vperm.xlu0 %285, %v203
        %v287 = vpop.permute.xlu0 %286
        %290 = vset.pattern.permute.xlu0 0
        %291 = vperm.xlu0 %290, %v204
        %v292 = vpop.permute.xlu0 %291
        %295 = vset.pattern.permute.xlu0 0
        %296 = vperm.xlu0 %295, %v205
        %v297 = vpop.permute.xlu0 %296
        %300 = vset.pattern.permute.xlu0 0
        %301 = vperm.xlu0 %300, %v206
        %v302 = vpop.permute.xlu0 %301
        %305 = vset.pattern.permute.xlu0 0
        %306 = vperm.xlu0 %305, %v207
        %v307 = vpop.permute.xlu0 %306
        %310 = vset.pattern.permute.xlu0 0
        %311 = vperm.xlu0 %310, %v208
        %v312 = vpop.permute.xlu0 %311
        %315 = vset.pattern.permute.xlu0 0
        %316 = vperm.xlu0 %315, %v209
        %v317 = vpop.permute.xlu0 %316
        %320 = vset.pattern.permute.xlu0 0
        %321 = vperm.xlu0 %320, %v210
        %v322 = vpop.permute.xlu0 %321
        %325 = vset.pattern.permute.xlu0 0
        %326 = vperm.xlu0 %325, %v211
        %v327 = vpop.permute.xlu0 %326
        %330 = vset.pattern.permute.xlu0 0
        %331 = vperm.xlu0 %330, %v212
        %v332 = vpop.permute.xlu0 %331
        %335 = vset.pattern.permute.xlu0 0
        %336 = vperm.xlu0 %335, %v213
        %v337 = vpop.permute.xlu0 %336
        %340 = vset.pattern.permute.xlu0 0
        %341 = vperm.xlu0 %340, %v214
        %v342 = vpop.permute.xlu0 %341
        %345 = vset.pattern.permute.xlu0 0
        %346 = vperm.xlu0 %345, %v215
        %v347 = vpop.permute.xlu0 %346
        %350 = vset.pattern.permute.xlu0 0
        %351 = vperm.xlu0 %350, %v216
        %v352 = vpop.permute.xlu0 %351
        %355 = vset.pattern.permute.xlu0 0
        %356 = vperm.xlu0 %355, %v217
        %v357 = vpop.permute.xlu0 %356
        %360 = vset.pattern.permute.xlu0 0
        %361 = vperm.xlu0 %360, %v218
        %v362 = vpop.permute.xlu0 %361
        %365 = vset.pattern.permute.xlu0 0
        %366 = vperm.xlu0 %365, %v219
        %v367 = vpop.permute.xlu0 %366
        %370 = vset.pattern.permute.xlu0 0
        %371 = vperm.xlu0 %370, %v220
        %v372 = vpop.permute.xlu0 %371
        %375 = vset.pattern.permute.xlu0 0
        %376 = vperm.xlu0 %375, %v221
        %v377 = vpop.permute.xlu0 %376
        %380 = vset.pattern.permute.xlu0 0
        %381 = vperm.xlu0 %380, %v222
        %v382 = vpop.permute.xlu0 %381
        %385 = vset.pattern.permute.xlu0 0
        %386 = vperm.xlu0 %385, %v223
        %v387 = vpop.permute.xlu0 %386
        %390 = vset.pattern.permute.xlu0 0
        %391 = vperm.xlu0 %390, %v224
        %v392 = vpop.permute.xlu0 %391
        %395 = vset.pattern.permute.xlu0 0
        %396 = vperm.xlu0 %395, %v225
        %v397 = vpop.permute.xlu0 %396
        %400 = vset.pattern.permute.xlu0 0
        %401 = vperm.xlu0 %400, %v226
        %v402 = vpop.permute.xlu0 %401
        %405 = vset.pattern.permute.xlu0 0
        %406 = vperm.xlu0 %405, %v227
        %v407 = vpop.permute.xlu0 %406
        %410 = vset.pattern.permute.xlu0 0
        %411 = vperm.xlu0 %410, %v228
        %v412 = vpop.permute.xlu0 %411
        %415 = vset.pattern.permute.xlu0 0
        %416 = vperm.xlu0 %415, %v229
        %v417 = vpop.permute.xlu0 %416
        %420 = vset.pattern.permute.xlu0 0
        %421 = vperm.xlu0 %420, %v230
        %v422 = vpop.permute.xlu0 %421
        %425 = vset.pattern.permute.xlu0 0
        %426 = vperm.xlu0 %425, %v231
        %v427 = vpop.permute.xlu0 %426
        %430 = vset.pattern.permute.xlu0 0
        %431 = vperm.xlu0 %430, %v232
        %v432 = vpop.permute.xlu0 %431
        %435 = vset.pattern.permute.xlu0 0
        %436 = vperm.xlu0 %435, %v233
        %v437 = vpop.permute.xlu0 %436
        %440 = vset.pattern.permute.xlu0 0
        %441 = vperm.xlu0 %440, %v234
        %v442 = vpop.permute.xlu0 %441
        %445 = vset.pattern.permute.xlu0 0
        %446 = vperm.xlu0 %445, %v235
        %v447 = vpop.permute.xlu0 %446
        %450 = vset.pattern.permute.xlu0 0
        %451 = vperm.xlu0 %450, %v236
        %v452 = vpop.permute.xlu0 %451
        %455 = vset.pattern.permute.xlu0 0
        %456 = vperm.xlu0 %455, %v237
        %v457 = vpop.permute.xlu0 %456
        %460 = vset.pattern.permute.xlu0 0
        %461 = vperm.xlu0 %460, %v238
        %v462 = vpop.permute.xlu0 %461
        %465 = vset.pattern.permute.xlu0 0
        %466 = vperm.xlu0 %465, %v239
        %v467 = vpop.permute.xlu0 %466
        %470 = vset.pattern.permute.xlu0 0
        %471 = vperm.xlu0 %470, %v240
        %v472 = vpop.permute.xlu0 %471
        %475 = vset.pattern.permute.xlu0 0
        %476 = vperm.xlu0 %475, %v241
        %v477 = vpop.permute.xlu0 %476
        %480 = vset.pattern.permute.xlu0 0
        %481 = vperm.xlu0 %480, %v242
        %v482 = vpop.permute.xlu0 %481
        %485 = vset.pattern.permute.xlu0 0
        %486 = vperm.xlu0 %485, %v243
        %v487 = vpop.permute.xlu0 %486
        %490 = vset.pattern.permute.xlu0 0
        %491 = vperm.xlu0 %490, %v244
        %v492 = vpop.permute.xlu0 %491
        %495 = vset.pattern.permute.xlu0 0
        %496 = vperm.xlu0 %495, %v245
        %v497 = vpop.permute.xlu0 %496
        %500 = vset.pattern.permute.xlu0 0
        %501 = vperm.xlu0 %500, %v246
        %v502 = vpop.permute.xlu0 %501
        %505 = vset.pattern.permute.xlu0 0
        %506 = vperm.xlu0 %505, %v247
        %v507 = vpop.permute.xlu0 %506
        %510 = vset.pattern.permute.xlu0 0
        %511 = vperm.xlu0 %510, %v248
        %v512 = vpop.permute.xlu0 %511
        %515 = vset.pattern.permute.xlu0 0
        %516 = vperm.xlu0 %515, %v249
        %v517 = vpop.permute.xlu0 %516
        %520 = vset.pattern.permute.xlu0 0
        %521 = vperm.xlu0 %520, %v250
        %v522 = vpop.permute.xlu0 %521
        %525 = vset.pattern.permute.xlu0 0
        %526 = vperm.xlu0 %525, %v251
        %v527 = vpop.permute.xlu0 %526
        %530 = vset.pattern.permute.xlu0 0
        %531 = vperm.xlu0 %530, %v252
        %v532 = vpop.permute.xlu0 %531
        %535 = vset.pattern.permute.xlu0 0
        %536 = vperm.xlu0 %535, %v253
        %v537 = vpop.permute.xlu0 %536
        %540 = vset.pattern.permute.xlu0 0
        %541 = vperm.xlu0 %540, %v254
        %v542 = vpop.permute.xlu0 %541
        %545 = vset.pattern.permute.xlu0 0
        %546 = vperm.xlu0 %545, %v255
        %v547 = vpop.permute.xlu0 %546
        %550 = vset.pattern.permute.xlu0 0
        %551 = vperm.xlu0 %550, %v256
        %v552 = vpop.permute.xlu0 %551
        %555 = vset.pattern.permute.xlu0 0
        %556 = vperm.xlu0 %555, %v257
        %v557 = vpop.permute.xlu0 %556
        %560 = vset.pattern.permute.xlu0 0
        %561 = vperm.xlu0 %560, %v258
        %v562 = vpop.permute.xlu0 %561
        %565 = vset.pattern.permute.xlu0 0
        %566 = vperm.xlu0 %565, %v259
        %v567 = vpop.permute.xlu0 %566
        %570 = vset.pattern.permute.xlu0 0
        %571 = vperm.xlu0 %570, %v260
        %v572 = vpop.permute.xlu0 %571
        %575 = vset.pattern.permute.xlu0 0
        %576 = vperm.xlu0 %575, %v261
        %v577 = vpop.permute.xlu0 %576
        %580 = vset.pattern.permute.xlu0 0
        %581 = vperm.xlu0 %580, %v262
        %v582 = vpop.permute.xlu0 %581
        %v584 = vperm.slane %v263, 0
        %v585 = vmul.f32 %v267, %v584
        %v586 = vmul.f32 %v272, %v584
        %v587 = vmul.f32 %v277, %v584
        %v588 = vmul.f32 %v282, %v584
        %v589 = vmul.f32 %v287, %v584
        %v590 = vmul.f32 %v292, %v584
        %v591 = vmul.f32 %v297, %v584
        %v592 = vmul.f32 %v302, %v584
        %v593 = vmul.f32 %v307, %v584
        %v594 = vmul.f32 %v312, %v584
        %v595 = vmul.f32 %v317, %v584
        %v596 = vmul.f32 %v322, %v584
        %v597 = vmul.f32 %v327, %v584
        %v598 = vmul.f32 %v332, %v584
        %v599 = vmul.f32 %v337, %v584
        %v600 = vmul.f32 %v342, %v584
        %v601 = vmul.f32 %v347, %v584
        %v602 = vmul.f32 %v352, %v584
        %v603 = vmul.f32 %v357, %v584
        %v604 = vmul.f32 %v362, %v584
        %v605 = vmul.f32 %v367, %v584
        %v606 = vmul.f32 %v372, %v584
        %v607 = vmul.f32 %v377, %v584
        %v608 = vmul.f32 %v382, %v584
        %v609 = vmul.f32 %v387, %v584
        %v610 = vmul.f32 %v392, %v584
        %v611 = vmul.f32 %v397, %v584
        %v612 = vmul.f32 %v402, %v584
        %v613 = vmul.f32 %v407, %v584
        %v614 = vmul.f32 %v412, %v584
        %v615 = vmul.f32 %v417, %v584
        %v616 = vmul.f32 %v422, %v584
        %v617 = vmul.f32 %v427, %v584
        %v618 = vmul.f32 %v432, %v584
        %v619 = vmul.f32 %v437, %v584
        %v620 = vmul.f32 %v442, %v584
        %v621 = vmul.f32 %v447, %v584
        %v622 = vmul.f32 %v452, %v584
        %v623 = vmul.f32 %v457, %v584
        %v624 = vmul.f32 %v462, %v584
        %v625 = vmul.f32 %v467, %v584
        %v626 = vmul.f32 %v472, %v584
        %v627 = vmul.f32 %v477, %v584
        %v628 = vmul.f32 %v482, %v584
        %v629 = vmul.f32 %v487, %v584
        %v630 = vmul.f32 %v492, %v584
        %v631 = vmul.f32 %v497, %v584
        %v632 = vmul.f32 %v502, %v584
        %v633 = vmul.f32 %v507, %v584
        %v634 = vmul.f32 %v512, %v584
        %v635 = vmul.f32 %v517, %v584
        %v636 = vmul.f32 %v522, %v584
        %v637 = vmul.f32 %v527, %v584
        %v638 = vmul.f32 %v532, %v584
        %v639 = vmul.f32 %v537, %v584
        %v640 = vmul.f32 %v542, %v584
        %v641 = vmul.f32 %v547, %v584
        %v642 = vmul.f32 %v552, %v584
        %v643 = vmul.f32 %v557, %v584
        %v644 = vmul.f32 %v562, %v584
        %v645 = vmul.f32 %v567, %v584
        %v646 = vmul.f32 %v572, %v584
        %v647 = vmul.f32 %v577, %v584
        %v648 = vmul.f32 %v582, %v584
        %v649 = vld [vmem:[%s1 + $0x1] sm:$0x1]
        %650 = vset.pattern.permute.xlu0 1
        %651 = vperm.xlu0 %650, %v199
        %v652 = vpop.permute.xlu0 %651
        %654 = vset.pattern.permute.xlu0 1
        %655 = vperm.xlu0 %654, %v200
        %v656 = vpop.permute.xlu0 %655
        %658 = vset.pattern.permute.xlu0 1
        %659 = vperm.xlu0 %658, %v201
        %v660 = vpop.permute.xlu0 %659
        %662 = vset.pattern.permute.xlu0 1
        %663 = vperm.xlu0 %662, %v202
        %v664 = vpop.permute.xlu0 %663
        %666 = vset.pattern.permute.xlu0 1
        %667 = vperm.xlu0 %666, %v203
        %v668 = vpop.permute.xlu0 %667
        %670 = vset.pattern.permute.xlu0 1
        %671 = vperm.xlu0 %670, %v204
        %v672 = vpop.permute.xlu0 %671
        %674 = vset.pattern.permute.xlu0 1
        %675 = vperm.xlu0 %674, %v205
        %v676 = vpop.permute.xlu0 %675
        %678 = vset.pattern.permute.xlu0 1
        %679 = vperm.xlu0 %678, %v206
        %v680 = vpop.permute.xlu0 %679
        %682 = vset.pattern.permute.xlu0 1
        %683 = vperm.xlu0 %682, %v207
        %v684 = vpop.permute.xlu0 %683
        %686 = vset.pattern.permute.xlu0 1
        %687 = vperm.xlu0 %686, %v208
        %v688 = vpop.permute.xlu0 %687
        %690 = vset.pattern.permute.xlu0 1
        %691 = vperm.xlu0 %690, %v209
        %v692 = vpop.permute.xlu0 %691
        %694 = vset.pattern.permute.xlu0 1
        %695 = vperm.xlu0 %694, %v210
        %v696 = vpop.permute.xlu0 %695
        %698 = vset.pattern.permute.xlu0 1
        %699 = vperm.xlu0 %698, %v211
        %v700 = vpop.permute.xlu0 %699
        %702 = vset.pattern.permute.xlu0 1
        %703 = vperm.xlu0 %702, %v212
        %v704 = vpop.permute.xlu0 %703
        %706 = vset.pattern.permute.xlu0 1
        %707 = vperm.xlu0 %706, %v213
        %v708 = vpop.permute.xlu0 %707
        %710 = vset.pattern.permute.xlu0 1
        %711 = vperm.xlu0 %710, %v214
        %v712 = vpop.permute.xlu0 %711
        %714 = vset.pattern.permute.xlu0 1
        %715 = vperm.xlu0 %714, %v215
        %v716 = vpop.permute.xlu0 %715
        %718 = vset.pattern.permute.xlu0 1
        %719 = vperm.xlu0 %718, %v216
        %v720 = vpop.permute.xlu0 %719
        %722 = vset.pattern.permute.xlu0 1
        %723 = vperm.xlu0 %722, %v217
        %v724 = vpop.permute.xlu0 %723
        %726 = vset.pattern.permute.xlu0 1
        %727 = vperm.xlu0 %726, %v218
        %v728 = vpop.permute.xlu0 %727
        %730 = vset.pattern.permute.xlu0 1
        %731 = vperm.xlu0 %730, %v219
        %v732 = vpop.permute.xlu0 %731
        %734 = vset.pattern.permute.xlu0 1
        %735 = vperm.xlu0 %734, %v220
        %v736 = vpop.permute.xlu0 %735
        %738 = vset.pattern.permute.xlu0 1
        %739 = vperm.xlu0 %738, %v221
        %v740 = vpop.permute.xlu0 %739
        %742 = vset.pattern.permute.xlu0 1
        %743 = vperm.xlu0 %742, %v222
        %v744 = vpop.permute.xlu0 %743
        %746 = vset.pattern.permute.xlu0 1
        %747 = vperm.xlu0 %746, %v223
        %v748 = vpop.permute.xlu0 %747
        %750 = vset.pattern.permute.xlu0 1
        %751 = vperm.xlu0 %750, %v224
        %v752 = vpop.permute.xlu0 %751
        %754 = vset.pattern.permute.xlu0 1
        %755 = vperm.xlu0 %754, %v225
        %v756 = vpop.permute.xlu0 %755
        %758 = vset.pattern.permute.xlu0 1
        %759 = vperm.xlu0 %758, %v226
        %v760 = vpop.permute.xlu0 %759
        %762 = vset.pattern.permute.xlu0 1
        %763 = vperm.xlu0 %762, %v227
        %v764 = vpop.permute.xlu0 %763
        %766 = vset.pattern.permute.xlu0 1
        %767 = vperm.xlu0 %766, %v228
        %v768 = vpop.permute.xlu0 %767
        %770 = vset.pattern.permute.xlu0 1
        %771 = vperm.xlu0 %770, %v229
        %v772 = vpop.permute.xlu0 %771
        %774 = vset.pattern.permute.xlu0 1
        %775 = vperm.xlu0 %774, %v230
        %v776 = vpop.permute.xlu0 %775
        %778 = vset.pattern.permute.xlu0 1
        %779 = vperm.xlu0 %778, %v231
        %v780 = vpop.permute.xlu0 %779
        %782 = vset.pattern.permute.xlu0 1
        %783 = vperm.xlu0 %782, %v232
        %v784 = vpop.permute.xlu0 %783
        %786 = vset.pattern.permute.xlu0 1
        %787 = vperm.xlu0 %786, %v233
        %v788 = vpop.permute.xlu0 %787
        %790 = vset.pattern.permute.xlu0 1
        %791 = vperm.xlu0 %790, %v234
        %v792 = vpop.permute.xlu0 %791
        %794 = vset.pattern.permute.xlu0 1
        %795 = vperm.xlu0 %794, %v235
        %v796 = vpop.permute.xlu0 %795
        %798 = vset.pattern.permute.xlu0 1
        %799 = vperm.xlu0 %798, %v236
        %v800 = vpop.permute.xlu0 %799
        %802 = vset.pattern.permute.xlu0 1
        %803 = vperm.xlu0 %802, %v237
        %v804 = vpop.permute.xlu0 %803
        %806 = vset.pattern.permute.xlu0 1
        %807 = vperm.xlu0 %806, %v238
        %v808 = vpop.permute.xlu0 %807
        %810 = vset.pattern.permute.xlu0 1
        %811 = vperm.xlu0 %810, %v239
        %v812 = vpop.permute.xlu0 %811
        %814 = vset.pattern.permute.xlu0 1
        %815 = vperm.xlu0 %814, %v240
        %v816 = vpop.permute.xlu0 %815
        %818 = vset.pattern.permute.xlu0 1
        %819 = vperm.xlu0 %818, %v241
        %v820 = vpop.permute.xlu0 %819
        %822 = vset.pattern.permute.xlu0 1
        %823 = vperm.xlu0 %822, %v242
        %v824 = vpop.permute.xlu0 %823
        %826 = vset.pattern.permute.xlu0 1
        %827 = vperm.xlu0 %826, %v243
        %v828 = vpop.permute.xlu0 %827
        %830 = vset.pattern.permute.xlu0 1
        %831 = vperm.xlu0 %830, %v244
        %v832 = vpop.permute.xlu0 %831
        %834 = vset.pattern.permute.xlu0 1
        %835 = vperm.xlu0 %834, %v245
        %v836 = vpop.permute.xlu0 %835
        %838 = vset.pattern.permute.xlu0 1
        %839 = vperm.xlu0 %838, %v246
        %v840 = vpop.permute.xlu0 %839
        %842 = vset.pattern.permute.xlu0 1
        %843 = vperm.xlu0 %842, %v247
        %v844 = vpop.permute.xlu0 %843
        %846 = vset.pattern.permute.xlu0 1
        %847 = vperm.xlu0 %846, %v248
        %v848 = vpop.permute.xlu0 %847
        %850 = vset.pattern.permute.xlu0 1
        %851 = vperm.xlu0 %850, %v249
        %v852 = vpop.permute.xlu0 %851
        %854 = vset.pattern.permute.xlu0 1
        %855 = vperm.xlu0 %854, %v250
        %v856 = vpop.permute.xlu0 %855
        %858 = vset.pattern.permute.xlu0 1
        %859 = vperm.xlu0 %858, %v251
        %v860 = vpop.permute.xlu0 %859
        %862 = vset.pattern.permute.xlu0 1
        %863 = vperm.xlu0 %862, %v252
        %v864 = vpop.permute.xlu0 %863
        %866 = vset.pattern.permute.xlu0 1
        %867 = vperm.xlu0 %866, %v253
        %v868 = vpop.permute.xlu0 %867
        %870 = vset.pattern.permute.xlu0 1
        %871 = vperm.xlu0 %870, %v254
        %v872 = vpop.permute.xlu0 %871
        %874 = vset.pattern.permute.xlu0 1
        %875 = vperm.xlu0 %874, %v255
        %v876 = vpop.permute.xlu0 %875
        %878 = vset.pattern.permute.xlu0 1
        %879 = vperm.xlu0 %878, %v256
        %v880 = vpop.permute.xlu0 %879
        %882 = vset.pattern.permute.xlu0 1
        %883 = vperm.xlu0 %882, %v257
        %v884 = vpop.permute.xlu0 %883
        %886 = vset.pattern.permute.xlu0 1
        %887 = vperm.xlu0 %886, %v258
        %v888 = vpop.permute.xlu0 %887
        %890 = vset.pattern.permute.xlu0 1
        %891 = vperm.xlu0 %890, %v259
        %v892 = vpop.permute.xlu0 %891
        %894 = vset.pattern.permute.xlu0 1
        %895 = vperm.xlu0 %894, %v260
        %v896 = vpop.permute.xlu0 %895
        %898 = vset.pattern.permute.xlu0 1
        %899 = vperm.xlu0 %898, %v261
        %v900 = vpop.permute.xlu0 %899
        %902 = vset.pattern.permute.xlu0 1
        %903 = vperm.xlu0 %902, %v262
        %v904 = vpop.permute.xlu0 %903
        %v906 = vperm.slane %v649, 0
        %v907 = vmul.f32 %v652, %v906
        %v908 = vmul.f32 %v656, %v906
        %v909 = vmul.f32 %v660, %v906
        %v910 = vmul.f32 %v664, %v906
        %v911 = vmul.f32 %v668, %v906
        %v912 = vmul.f32 %v672, %v906
        %v913 = vmul.f32 %v676, %v906
        %v914 = vmul.f32 %v680, %v906
        %v915 = vmul.f32 %v684, %v906
        %v916 = vmul.f32 %v688, %v906
        %v917 = vmul.f32 %v692, %v906
        %v918 = vmul.f32 %v696, %v906
        %v919 = vmul.f32 %v700, %v906
        %v920 = vmul.f32 %v704, %v906
        %v921 = vmul.f32 %v708, %v906
        %v922 = vmul.f32 %v712, %v906
        %v923 = vmul.f32 %v716, %v906
        %v924 = vmul.f32 %v720, %v906
        %v925 = vmul.f32 %v724, %v906
        %v926 = vmul.f32 %v728, %v906
        %v927 = vmul.f32 %v732, %v906
        %v928 = vmul.f32 %v736, %v906
        %v929 = vmul.f32 %v740, %v906
        %v930 = vmul.f32 %v744, %v906
        %v931 = vmul.f32 %v748, %v906
        %v932 = vmul.f32 %v752, %v906
        %v933 = vmul.f32 %v756, %v906
        %v934 = vmul.f32 %v760, %v906
        %v935 = vmul.f32 %v764, %v906
        %v936 = vmul.f32 %v768, %v906
        %v937 = vmul.f32 %v772, %v906
        %v938 = vmul.f32 %v776, %v906
        %v939 = vmul.f32 %v780, %v906
        %v940 = vmul.f32 %v784, %v906
        %v941 = vmul.f32 %v788, %v906
        %v942 = vmul.f32 %v792, %v906
        %v943 = vmul.f32 %v796, %v906
        %v944 = vmul.f32 %v800, %v906
        %v945 = vmul.f32 %v804, %v906
        %v946 = vmul.f32 %v808, %v906
        %v947 = vmul.f32 %v812, %v906
        %v948 = vmul.f32 %v816, %v906
        %v949 = vmul.f32 %v820, %v906
        %v950 = vmul.f32 %v824, %v906
        %v951 = vmul.f32 %v828, %v906
        %v952 = vmul.f32 %v832, %v906
        %v953 = vmul.f32 %v836, %v906
        %v954 = vmul.f32 %v840, %v906
        %v955 = vmul.f32 %v844, %v906
        %v956 = vmul.f32 %v848, %v906
        %v957 = vmul.f32 %v852, %v906
        %v958 = vmul.f32 %v856, %v906
        %v959 = vmul.f32 %v860, %v906
        %v960 = vmul.f32 %v864, %v906
        %v961 = vmul.f32 %v868, %v906
        %v962 = vmul.f32 %v872, %v906
        %v963 = vmul.f32 %v876, %v906
        %v964 = vmul.f32 %v880, %v906
        %v965 = vmul.f32 %v884, %v906
        %v966 = vmul.f32 %v888, %v906
        %v967 = vmul.f32 %v892, %v906
        %v968 = vmul.f32 %v896, %v906
        %v969 = vmul.f32 %v900, %v906
        %v970 = vmul.f32 %v904, %v906
        %v971 = vadd.f32 %v585, %v907
        %v972 = vadd.f32 %v586, %v908
        %v973 = vadd.f32 %v587, %v909
        %v974 = vadd.f32 %v588, %v910
        %v975 = vadd.f32 %v589, %v911
        %v976 = vadd.f32 %v590, %v912
        %v977 = vadd.f32 %v591, %v913
        %v978 = vadd.f32 %v592, %v914
        %v979 = vadd.f32 %v593, %v915
        %v980 = vadd.f32 %v594, %v916
        %v981 = vadd.f32 %v595, %v917
        %v982 = vadd.f32 %v596, %v918
        %v983 = vadd.f32 %v597, %v919
        %v984 = vadd.f32 %v598, %v920
        %v985 = vadd.f32 %v599, %v921
        %v986 = vadd.f32 %v600, %v922
        %v987 = vadd.f32 %v601, %v923
        %v988 = vadd.f32 %v602, %v924
        %v989 = vadd.f32 %v603, %v925
        %v990 = vadd.f32 %v604, %v926
        %v991 = vadd.f32 %v605, %v927
        %v992 = vadd.f32 %v606, %v928
        %v993 = vadd.f32 %v607, %v929
        %v994 = vadd.f32 %v608, %v930
        %v995 = vadd.f32 %v609, %v931
        %v996 = vadd.f32 %v610, %v932
        %v997 = vadd.f32 %v611, %v933
        %v998 = vadd.f32 %v612, %v934
        %v999 = vadd.f32 %v613, %v935
        %v1000 = vadd.f32 %v614, %v936
        %v1001 = vadd.f32 %v615, %v937
        %v1002 = vadd.f32 %v616, %v938
        %v1003 = vadd.f32 %v617, %v939
        %v1004 = vadd.f32 %v618, %v940
        %v1005 = vadd.f32 %v619, %v941
        %v1006 = vadd.f32 %v620, %v942
        %v1007 = vadd.f32 %v621, %v943
        %v1008 = vadd.f32 %v622, %v944
        %v1009 = vadd.f32 %v623, %v945
        %v1010 = vadd.f32 %v624, %v946
        %v1011 = vadd.f32 %v625, %v947
        %v1012 = vadd.f32 %v626, %v948
        %v1013 = vadd.f32 %v627, %v949
        %v1014 = vadd.f32 %v628, %v950
        %v1015 = vadd.f32 %v629, %v951
        %v1016 = vadd.f32 %v630, %v952
        %v1017 = vadd.f32 %v631, %v953
        %v1018 = vadd.f32 %v632, %v954
        %v1019 = vadd.f32 %v633, %v955
        %v1020 = vadd.f32 %v634, %v956
        %v1021 = vadd.f32 %v635, %v957
        %v1022 = vadd.f32 %v636, %v958
        %v1023 = vadd.f32 %v637, %v959
        %v1024 = vadd.f32 %v638, %v960
        %v1025 = vadd.f32 %v639, %v961
        %v1026 = vadd.f32 %v640, %v962
        %v1027 = vadd.f32 %v641, %v963
        %v1028 = vadd.f32 %v642, %v964
        %v1029 = vadd.f32 %v643, %v965
        %v1030 = vadd.f32 %v644, %v966
        %v1031 = vadd.f32 %v645, %v967
        %v1032 = vadd.f32 %v646, %v968
        %v1033 = vadd.f32 %v647, %v969
        %v1034 = vadd.f32 %v648, %v970
        %v1035 = vld [vmem:[%s3] sm:$0x1]
        %v1037 = vperm.slane %v1035, 0
        %v1039 = vadd.f32 %v971, %v1037
        %v1040 = vadd.f32 %v972, %v1037
        %v1041 = vadd.f32 %v973, %v1037
        %v1042 = vadd.f32 %v974, %v1037
        %v1043 = vadd.f32 %v975, %v1037
        %v1044 = vadd.f32 %v976, %v1037
        %v1045 = vadd.f32 %v977, %v1037
        %v1046 = vadd.f32 %v978, %v1037
        %v1047 = vadd.f32 %v979, %v1037
        %v1048 = vadd.f32 %v980, %v1037
        %v1049 = vadd.f32 %v981, %v1037
        %v1050 = vadd.f32 %v982, %v1037
        %v1051 = vadd.f32 %v983, %v1037
        %v1052 = vadd.f32 %v984, %v1037
        %v1053 = vadd.f32 %v985, %v1037
        %v1054 = vadd.f32 %v986, %v1037
        %v1055 = vadd.f32 %v987, %v1037
        %v1056 = vadd.f32 %v988, %v1037
        %v1057 = vadd.f32 %v989, %v1037
        %v1058 = vadd.f32 %v990, %v1037
        %v1059 = vadd.f32 %v991, %v1037
        %v1060 = vadd.f32 %v992, %v1037
        %v1061 = vadd.f32 %v993, %v1037
        %v1062 = vadd.f32 %v994, %v1037
        %v1063 = vadd.f32 %v995, %v1037
        %v1064 = vadd.f32 %v996, %v1037
        %v1065 = vadd.f32 %v997, %v1037
        %v1066 = vadd.f32 %v998, %v1037
        %v1067 = vadd.f32 %v999, %v1037
        %v1068 = vadd.f32 %v1000, %v1037
        %v1069 = vadd.f32 %v1001, %v1037
        %v1070 = vadd.f32 %v1002, %v1037
        %v1071 = vadd.f32 %v1003, %v1037
        %v1072 = vadd.f32 %v1004, %v1037
        %v1073 = vadd.f32 %v1005, %v1037
        %v1074 = vadd.f32 %v1006, %v1037
        %v1075 = vadd.f32 %v1007, %v1037
        %v1076 = vadd.f32 %v1008, %v1037
        %v1077 = vadd.f32 %v1009, %v1037
        %v1078 = vadd.f32 %v1010, %v1037
        %v1079 = vadd.f32 %v1011, %v1037
        %v1080 = vadd.f32 %v1012, %v1037
        %v1081 = vadd.f32 %v1013, %v1037
        %v1082 = vadd.f32 %v1014, %v1037
        %v1083 = vadd.f32 %v1015, %v1037
        %v1084 = vadd.f32 %v1016, %v1037
        %v1085 = vadd.f32 %v1017, %v1037
        %v1086 = vadd.f32 %v1018, %v1037
        %v1087 = vadd.f32 %v1019, %v1037
        %v1088 = vadd.f32 %v1020, %v1037
        %v1089 = vadd.f32 %v1021, %v1037
        %v1090 = vadd.f32 %v1022, %v1037
        %v1091 = vadd.f32 %v1023, %v1037
        %v1092 = vadd.f32 %v1024, %v1037
        %v1093 = vadd.f32 %v1025, %v1037
        %v1094 = vadd.f32 %v1026, %v1037
        %v1095 = vadd.f32 %v1027, %v1037
        %v1096 = vadd.f32 %v1028, %v1037
        %v1097 = vadd.f32 %v1029, %v1037
        %v1098 = vadd.f32 %v1030, %v1037
        %v1099 = vadd.f32 %v1031, %v1037
        %v1100 = vadd.f32 %v1032, %v1037
        %v1101 = vadd.f32 %v1033, %v1037
        %v1102 = vadd.f32 %v1034, %v1037
        %v1103 = vtanh.pop %v1039
        %v1104 = vtanh.pop %v1040
        %v1105 = vtanh.pop %v1041
        %v1106 = vtanh.pop %v1042
        %v1107 = vtanh.pop %v1043
        %v1108 = vtanh.pop %v1044
        %v1109 = vtanh.pop %v1045
        %v1110 = vtanh.pop %v1046
        %v1111 = vtanh.pop %v1047
        %v1112 = vtanh.pop %v1048
        %v1113 = vtanh.pop %v1049
        %v1114 = vtanh.pop %v1050
        %v1115 = vtanh.pop %v1051
        %v1116 = vtanh.pop %v1052
        %v1117 = vtanh.pop %v1053
        %v1118 = vtanh.pop %v1054
        %v1119 = vtanh.pop %v1055
        %v1120 = vtanh.pop %v1056
        %v1121 = vtanh.pop %v1057
        %v1122 = vtanh.pop %v1058
        %v1123 = vtanh.pop %v1059
        %v1124 = vtanh.pop %v1060
        %v1125 = vtanh.pop %v1061
        %v1126 = vtanh.pop %v1062
        %v1127 = vtanh.pop %v1063
        %v1128 = vtanh.pop %v1064
        %v1129 = vtanh.pop %v1065
        %v1130 = vtanh.pop %v1066
        %v1131 = vtanh.pop %v1067
        %v1132 = vtanh.pop %v1068
        %v1133 = vtanh.pop %v1069
        %v1134 = vtanh.pop %v1070
        %v1135 = vtanh.pop %v1071
        %v1136 = vtanh.pop %v1072
        %v1137 = vtanh.pop %v1073
        %v1138 = vtanh.pop %v1074
        %v1139 = vtanh.pop %v1075
        %v1140 = vtanh.pop %v1076
        %v1141 = vtanh.pop %v1077
        %v1142 = vtanh.pop %v1078
        %v1143 = vtanh.pop %v1079
        %v1144 = vtanh.pop %v1080
        %v1145 = vtanh.pop %v1081
        %v1146 = vtanh.pop %v1082
        %v1147 = vtanh.pop %v1083
        %v1148 = vtanh.pop %v1084
        %v1149 = vtanh.pop %v1085
        %v1150 = vtanh.pop %v1086
        %v1151 = vtanh.pop %v1087
        %v1152 = vtanh.pop %v1088
        %v1153 = vtanh.pop %v1089
        %v1154 = vtanh.pop %v1090
        %v1155 = vtanh.pop %v1091
        %v1156 = vtanh.pop %v1092
        %v1157 = vtanh.pop %v1093
        %v1158 = vtanh.pop %v1094
        %v1159 = vtanh.pop %v1095
        %v1160 = vtanh.pop %v1096
        %v1161 = vtanh.pop %v1097
        %v1162 = vtanh.pop %v1098
        %v1163 = vtanh.pop %v1099
        %v1164 = vtanh.pop %v1100
        %v1165 = vtanh.pop %v1101
        %v1166 = vtanh.pop %v1102
        %v1167 = vld [vmem:[%s2] sm:$0xff]
        %v1168 = vld [vmem:[%s2 + $0x8] sm:$0xff]
        %v1169 = vld [vmem:[%s2 + $0x10] sm:$0xff]
        %v1170 = vld [vmem:[%s2 + $0x18] sm:$0xff]
        %v1171 = vld [vmem:[%s2 + $0x20] sm:$0xff]
        %v1172 = vld [vmem:[%s2 + $0x28] sm:$0xff]
        %v1173 = vld [vmem:[%s2 + $0x30] sm:$0xff]
        %v1174 = vld [vmem:[%s2 + $0x38] sm:$0xff]
        %v1175 = vld [vmem:[%s2 + $0x40] sm:$0xff]
        %v1176 = vld [vmem:[%s2 + $0x48] sm:$0xff]
        %v1177 = vld [vmem:[%s2 + $0x50] sm:$0xff]
        %v1178 = vld [vmem:[%s2 + $0x58] sm:$0xff]
        %v1179 = vld [vmem:[%s2 + $0x60] sm:$0xff]
        %v1180 = vld [vmem:[%s2 + $0x68] sm:$0xff]
        %v1181 = vld [vmem:[%s2 + $0x70] sm:$0xff]
        %v1182 = vld [vmem:[%s2 + $0x78] sm:$0xff]
        %s1183 = scalar_lea.vmem %s3, 1
        %v1184 = vld [vmem:[%s1183] sm:$0x1]
        %v1186 = vperm.slane %v1184, 0
        %1188 = vmatpush.msra.mxu0 %v1182
        %1189 = vmatpush.msra.mxu0 %v1181
        %1190 = vmatpush.msra.mxu0 %v1180
        %1191 = vmatpush.msra.mxu0 %v1179
        %1192 = vmatpush.msra.mxu0 %v1178
        %1193 = vmatpush.msra.mxu0 %v1177
        %1194 = vmatpush.msra.mxu0 %v1176
        %1195 = vmatpush.msra.mxu0 %v1175
        %1196 = vmatpush.msra.mxu0 %v1174
        %1197 = vmatpush.msra.mxu0 %v1173
        %1198 = vmatpush.msra.mxu0 %v1172
        %1199 = vmatpush.msra.mxu0 %v1171
        %1200 = vmatpush.msra.mxu0 %v1170
        %1201 = vmatpush.msra.mxu0 %v1169
        %1202 = vmatpush.msra.mxu0 %v1168
        %1203 = vmatpush.msra.mxu0 %v1167
        %1204 = vmatmul.f32.gmra.mxu0 %v1103
        %v1205 = vpop.f32.mrf.mxu0
        %v1206 = vadd.f32 %v1186, %v1205
        %1207 = vmatmul.f32.gmra.mxu0 %v1104
        %v1208 = vpop.f32.mrf.mxu0
        %v1209 = vadd.f32 %v1186, %v1208
        %1210 = vmatmul.f32.gmra.mxu0 %v1105
        %v1211 = vpop.f32.mrf.mxu0
        %v1212 = vadd.f32 %v1186, %v1211
        %1213 = vmatmul.f32.gmra.mxu0 %v1106
        %v1214 = vpop.f32.mrf.mxu0
        %v1215 = vadd.f32 %v1186, %v1214
        %1216 = vmatmul.f32.gmra.mxu0 %v1107
        %v1217 = vpop.f32.mrf.mxu0
        %v1218 = vadd.f32 %v1186, %v1217
        %1219 = vmatmul.f32.gmra.mxu0 %v1108
        %v1220 = vpop.f32.mrf.mxu0
        %v1221 = vadd.f32 %v1186, %v1220
        %1222 = vmatmul.f32.gmra.mxu0 %v1109
        %v1223 = vpop.f32.mrf.mxu0
        %v1224 = vadd.f32 %v1186, %v1223
        %1225 = vmatmul.f32.gmra.mxu0 %v1110
        %v1226 = vpop.f32.mrf.mxu0
        %v1227 = vadd.f32 %v1186, %v1226
        %1228 = vmatmul.f32.gmra.mxu0 %v1111
        %v1229 = vpop.f32.mrf.mxu0
        %v1230 = vadd.f32 %v1186, %v1229
        %1231 = vmatmul.f32.gmra.mxu0 %v1112
        %v1232 = vpop.f32.mrf.mxu0
        %v1233 = vadd.f32 %v1186, %v1232
        %1234 = vmatmul.f32.gmra.mxu0 %v1113
        %v1235 = vpop.f32.mrf.mxu0
        %v1236 = vadd.f32 %v1186, %v1235
        %1237 = vmatmul.f32.gmra.mxu0 %v1114
        %v1238 = vpop.f32.mrf.mxu0
        %v1239 = vadd.f32 %v1186, %v1238
        %1240 = vmatmul.f32.gmra.mxu0 %v1115
        %v1241 = vpop.f32.mrf.mxu0
        %v1242 = vadd.f32 %v1186, %v1241
        %1243 = vmatmul.f32.gmra.mxu0 %v1116
        %v1244 = vpop.f32.mrf.mxu0
        %v1245 = vadd.f32 %v1186, %v1244
        %1246 = vmatmul.f32.gmra.mxu0 %v1117
        %v1247 = vpop.f32.mrf.mxu0
        %v1248 = vadd.f32 %v1186, %v1247
        %1249 = vmatmul.f32.gmra.mxu0 %v1118
        %v1250 = vpop.f32.mrf.mxu0
        %v1251 = vadd.f32 %v1186, %v1250
        %1252 = vmatmul.f32.gmra.mxu0 %v1119
        %v1253 = vpop.f32.mrf.mxu0
        %v1254 = vadd.f32 %v1186, %v1253
        %1255 = vmatmul.f32.gmra.mxu0 %v1120
        %v1256 = vpop.f32.mrf.mxu0
        %v1257 = vadd.f32 %v1186, %v1256
        %1258 = vmatmul.f32.gmra.mxu0 %v1121
        %v1259 = vpop.f32.mrf.mxu0
        %v1260 = vadd.f32 %v1186, %v1259
        %1261 = vmatmul.f32.gmra.mxu0 %v1122
        %v1262 = vpop.f32.mrf.mxu0
        %v1263 = vadd.f32 %v1186, %v1262
        %1264 = vmatmul.f32.gmra.mxu0 %v1123
        %v1265 = vpop.f32.mrf.mxu0
        %v1266 = vadd.f32 %v1186, %v1265
        %1267 = vmatmul.f32.gmra.mxu0 %v1124
        %v1268 = vpop.f32.mrf.mxu0
        %v1269 = vadd.f32 %v1186, %v1268
        %1270 = vmatmul.f32.gmra.mxu0 %v1125
        %v1271 = vpop.f32.mrf.mxu0
        %v1272 = vadd.f32 %v1186, %v1271
        %1273 = vmatmul.f32.gmra.mxu0 %v1126
        %v1274 = vpop.f32.mrf.mxu0
        %v1275 = vadd.f32 %v1186, %v1274
        %1276 = vmatmul.f32.gmra.mxu0 %v1127
        %v1277 = vpop.f32.mrf.mxu0
        %v1278 = vadd.f32 %v1186, %v1277
        %1279 = vmatmul.f32.gmra.mxu0 %v1128
        %v1280 = vpop.f32.mrf.mxu0
        %v1281 = vadd.f32 %v1186, %v1280
        %1282 = vmatmul.f32.gmra.mxu0 %v1129
        %v1283 = vpop.f32.mrf.mxu0
        %v1284 = vadd.f32 %v1186, %v1283
        %1285 = vmatmul.f32.gmra.mxu0 %v1130
        %v1286 = vpop.f32.mrf.mxu0
        %v1287 = vadd.f32 %v1186, %v1286
        %1288 = vmatmul.f32.gmra.mxu0 %v1131
        %v1289 = vpop.f32.mrf.mxu0
        %v1290 = vadd.f32 %v1186, %v1289
        %1291 = vmatmul.f32.gmra.mxu0 %v1132
        %v1292 = vpop.f32.mrf.mxu0
        %v1293 = vadd.f32 %v1186, %v1292
        %1294 = vmatmul.f32.gmra.mxu0 %v1133
        %v1295 = vpop.f32.mrf.mxu0
        %v1296 = vadd.f32 %v1186, %v1295
        %1297 = vmatmul.f32.gmra.mxu0 %v1134
        %v1298 = vpop.f32.mrf.mxu0
        %v1299 = vadd.f32 %v1186, %v1298
        %1300 = vmatmul.f32.gmra.mxu0 %v1135
        %v1301 = vpop.f32.mrf.mxu0
        %v1302 = vadd.f32 %v1186, %v1301
        %1303 = vmatmul.f32.gmra.mxu0 %v1136
        %v1304 = vpop.f32.mrf.mxu0
        %v1305 = vadd.f32 %v1186, %v1304
        %1306 = vmatmul.f32.gmra.mxu0 %v1137
        %v1307 = vpop.f32.mrf.mxu0
        %v1308 = vadd.f32 %v1186, %v1307
        %1309 = vmatmul.f32.gmra.mxu0 %v1138
        %v1310 = vpop.f32.mrf.mxu0
        %v1311 = vadd.f32 %v1186, %v1310
        %1312 = vmatmul.f32.gmra.mxu0 %v1139
        %v1313 = vpop.f32.mrf.mxu0
        %v1314 = vadd.f32 %v1186, %v1313
        %1315 = vmatmul.f32.gmra.mxu0 %v1140
        %v1316 = vpop.f32.mrf.mxu0
        %v1317 = vadd.f32 %v1186, %v1316
        %1318 = vmatmul.f32.gmra.mxu0 %v1141
        %v1319 = vpop.f32.mrf.mxu0
        %v1320 = vadd.f32 %v1186, %v1319
        %1321 = vmatmul.f32.gmra.mxu0 %v1142
        %v1322 = vpop.f32.mrf.mxu0
        %v1323 = vadd.f32 %v1186, %v1322
        %1324 = vmatmul.f32.gmra.mxu0 %v1143
        %v1325 = vpop.f32.mrf.mxu0
        %v1326 = vadd.f32 %v1186, %v1325
        %1327 = vmatmul.f32.gmra.mxu0 %v1144
        %v1328 = vpop.f32.mrf.mxu0
        %v1329 = vadd.f32 %v1186, %v1328
        %1330 = vmatmul.f32.gmra.mxu0 %v1145
        %v1331 = vpop.f32.mrf.mxu0
        %v1332 = vadd.f32 %v1186, %v1331
        %1333 = vmatmul.f32.gmra.mxu0 %v1146
        %v1334 = vpop.f32.mrf.mxu0
        %v1335 = vadd.f32 %v1186, %v1334
        %1336 = vmatmul.f32.gmra.mxu0 %v1147
        %v1337 = vpop.f32.mrf.mxu0
        %v1338 = vadd.f32 %v1186, %v1337
        %1339 = vmatmul.f32.gmra.mxu0 %v1148
        %v1340 = vpop.f32.mrf.mxu0
        %v1341 = vadd.f32 %v1186, %v1340
        %1342 = vmatmul.f32.gmra.mxu0 %v1149
        %v1343 = vpop.f32.mrf.mxu0
        %v1344 = vadd.f32 %v1186, %v1343
        %1345 = vmatmul.f32.gmra.mxu0 %v1150
        %v1346 = vpop.f32.mrf.mxu0
        %v1347 = vadd.f32 %v1186, %v1346
        %1348 = vmatmul.f32.gmra.mxu0 %v1151
        %v1349 = vpop.f32.mrf.mxu0
        %v1350 = vadd.f32 %v1186, %v1349
        %1351 = vmatmul.f32.gmra.mxu0 %v1152
        %v1352 = vpop.f32.mrf.mxu0
        %v1353 = vadd.f32 %v1186, %v1352
        %1354 = vmatmul.f32.gmra.mxu0 %v1153
        %v1355 = vpop.f32.mrf.mxu0
        %v1356 = vadd.f32 %v1186, %v1355
        %1357 = vmatmul.f32.gmra.mxu0 %v1154
        %v1358 = vpop.f32.mrf.mxu0
        %v1359 = vadd.f32 %v1186, %v1358
        %1360 = vmatmul.f32.gmra.mxu0 %v1155
        %v1361 = vpop.f32.mrf.mxu0
        %v1362 = vadd.f32 %v1186, %v1361
        %1363 = vmatmul.f32.gmra.mxu0 %v1156
        %v1364 = vpop.f32.mrf.mxu0
        %v1365 = vadd.f32 %v1186, %v1364
        %1366 = vmatmul.f32.gmra.mxu0 %v1157
        %v1367 = vpop.f32.mrf.mxu0
        %v1368 = vadd.f32 %v1186, %v1367
        %1369 = vmatmul.f32.gmra.mxu0 %v1158
        %v1370 = vpop.f32.mrf.mxu0
        %v1371 = vadd.f32 %v1186, %v1370
        %1372 = vmatmul.f32.gmra.mxu0 %v1159
        %v1373 = vpop.f32.mrf.mxu0
        %v1374 = vadd.f32 %v1186, %v1373
        %1375 = vmatmul.f32.gmra.mxu0 %v1160
        %v1376 = vpop.f32.mrf.mxu0
        %v1377 = vadd.f32 %v1186, %v1376
        %1378 = vmatmul.f32.gmra.mxu0 %v1161
        %v1379 = vpop.f32.mrf.mxu0
        %v1380 = vadd.f32 %v1186, %v1379
        %1381 = vmatmul.f32.gmra.mxu0 %v1162
        %v1382 = vpop.f32.mrf.mxu0
        %v1383 = vadd.f32 %v1186, %v1382
        %1384 = vmatmul.f32.gmra.mxu0 %v1163
        %v1385 = vpop.f32.mrf.mxu0
        %v1386 = vadd.f32 %v1186, %v1385
        %1387 = vmatmul.f32.gmra.mxu0 %v1164
        %v1388 = vpop.f32.mrf.mxu0
        %v1389 = vadd.f32 %v1186, %v1388
        %1390 = vmatmul.f32.gmra.mxu0 %v1165
        %v1391 = vpop.f32.mrf.mxu0
        %v1392 = vadd.f32 %v1186, %v1391
        %1393 = vmatmul.f32.gmra.mxu0 %v1166
        %v1394 = vpop.f32.mrf.mxu0
        %v1395 = vadd.f32 %v1186, %v1394
        %1396 = vdwg.mxu0
        %v1397 = vtanh.pop %v1206
        %v1398 = vtanh.pop %v1209
        %v1399 = vtanh.pop %v1212
        %v1400 = vtanh.pop %v1215
        %v1401 = vtanh.pop %v1218
        %v1402 = vtanh.pop %v1221
        %v1403 = vtanh.pop %v1224
        %v1404 = vtanh.pop %v1227
        %v1405 = vtanh.pop %v1230
        %v1406 = vtanh.pop %v1233
        %v1407 = vtanh.pop %v1236
        %v1408 = vtanh.pop %v1239
        %v1409 = vtanh.pop %v1242
        %v1410 = vtanh.pop %v1245
        %v1411 = vtanh.pop %v1248
        %v1412 = vtanh.pop %v1251
        %v1413 = vtanh.pop %v1254
        %v1414 = vtanh.pop %v1257
        %v1415 = vtanh.pop %v1260
        %v1416 = vtanh.pop %v1263
        %v1417 = vtanh.pop %v1266
        %v1418 = vtanh.pop %v1269
        %v1419 = vtanh.pop %v1272
        %v1420 = vtanh.pop %v1275
        %v1421 = vtanh.pop %v1278
        %v1422 = vtanh.pop %v1281
        %v1423 = vtanh.pop %v1284
        %v1424 = vtanh.pop %v1287
        %v1425 = vtanh.pop %v1290
        %v1426 = vtanh.pop %v1293
        %v1427 = vtanh.pop %v1296
        %v1428 = vtanh.pop %v1299
        %v1429 = vtanh.pop %v1302
        %v1430 = vtanh.pop %v1305
        %v1431 = vtanh.pop %v1308
        %v1432 = vtanh.pop %v1311
        %v1433 = vtanh.pop %v1314
        %v1434 = vtanh.pop %v1317
        %v1435 = vtanh.pop %v1320
        %v1436 = vtanh.pop %v1323
        %v1437 = vtanh.pop %v1326
        %v1438 = vtanh.pop %v1329
        %v1439 = vtanh.pop %v1332
        %v1440 = vtanh.pop %v1335
        %v1441 = vtanh.pop %v1338
        %v1442 = vtanh.pop %v1341
        %v1443 = vtanh.pop %v1344
        %v1444 = vtanh.pop %v1347
        %v1445 = vtanh.pop %v1350
        %v1446 = vtanh.pop %v1353
        %v1447 = vtanh.pop %v1356
        %v1448 = vtanh.pop %v1359
        %v1449 = vtanh.pop %v1362
        %v1450 = vtanh.pop %v1365
        %v1451 = vtanh.pop %v1368
        %v1452 = vtanh.pop %v1371
        %v1453 = vtanh.pop %v1374
        %v1454 = vtanh.pop %v1377
        %v1455 = vtanh.pop %v1380
        %v1456 = vtanh.pop %v1383
        %v1457 = vtanh.pop %v1386
        %v1458 = vtanh.pop %v1389
        %v1459 = vtanh.pop %v1392
        %v1460 = vtanh.pop %v1395
        %s1461 = scalar_lea.vmem %s2, 128
        %v1462 = vld [vmem:[%s1461] sm:$0xff]
        %v1463 = vld [vmem:[%s1461 + $0x8] sm:$0xff]
        %v1464 = vld [vmem:[%s1461 + $0x10] sm:$0xff]
        %v1465 = vld [vmem:[%s1461 + $0x18] sm:$0xff]
        %v1466 = vld [vmem:[%s1461 + $0x20] sm:$0xff]
        %v1467 = vld [vmem:[%s1461 + $0x28] sm:$0xff]
        %v1468 = vld [vmem:[%s1461 + $0x30] sm:$0xff]
        %v1469 = vld [vmem:[%s1461 + $0x38] sm:$0xff]
        %v1470 = vld [vmem:[%s1461 + $0x40] sm:$0xff]
        %v1471 = vld [vmem:[%s1461 + $0x48] sm:$0xff]
        %v1472 = vld [vmem:[%s1461 + $0x50] sm:$0xff]
        %v1473 = vld [vmem:[%s1461 + $0x58] sm:$0xff]
        %v1474 = vld [vmem:[%s1461 + $0x60] sm:$0xff]
        %v1475 = vld [vmem:[%s1461 + $0x68] sm:$0xff]
        %v1476 = vld [vmem:[%s1461 + $0x70] sm:$0xff]
        %v1477 = vld [vmem:[%s1461 + $0x78] sm:$0xff]
        %s1478 = scalar_lea.vmem %s3, 2
        %v1479 = vld [vmem:[%s1478] sm:$0x1]
        %v1481 = vperm.slane %v1479, 0
        %1483 = vmatpush.msra.mxu0 %v1477
        %1484 = vmatpush.msra.mxu0 %v1476
        %1485 = vmatpush.msra.mxu0 %v1475
        %1486 = vmatpush.msra.mxu0 %v1474
        %1487 = vmatpush.msra.mxu0 %v1473
        %1488 = vmatpush.msra.mxu0 %v1472
        %1489 = vmatpush.msra.mxu0 %v1471
        %1490 = vmatpush.msra.mxu0 %v1470
        %1491 = vmatpush.msra.mxu0 %v1469
        %1492 = vmatpush.msra.mxu0 %v1468
        %1493 = vmatpush.msra.mxu0 %v1467
        %1494 = vmatpush.msra.mxu0 %v1466
        %1495 = vmatpush.msra.mxu0 %v1465
        %1496 = vmatpush.msra.mxu0 %v1464
        %1497 = vmatpush.msra.mxu0 %v1463
        %1498 = vmatpush.msra.mxu0 %v1462
        %1499 = vmatmul.f32.gmra.mxu0 %v1397
        %v1500 = vpop.f32.mrf.mxu0
        %v1501 = vadd.f32 %v1481, %v1500
        %1502 = vmatmul.f32.gmra.mxu0 %v1398
        %v1503 = vpop.f32.mrf.mxu0
        %v1504 = vadd.f32 %v1481, %v1503
        %1505 = vmatmul.f32.gmra.mxu0 %v1399
        %v1506 = vpop.f32.mrf.mxu0
        %v1507 = vadd.f32 %v1481, %v1506
        %1508 = vmatmul.f32.gmra.mxu0 %v1400
        %v1509 = vpop.f32.mrf.mxu0
        %v1510 = vadd.f32 %v1481, %v1509
        %1511 = vmatmul.f32.gmra.mxu0 %v1401
        %v1512 = vpop.f32.mrf.mxu0
        %v1513 = vadd.f32 %v1481, %v1512
        %1514 = vmatmul.f32.gmra.mxu0 %v1402
        %v1515 = vpop.f32.mrf.mxu0
        %v1516 = vadd.f32 %v1481, %v1515
        %1517 = vmatmul.f32.gmra.mxu0 %v1403
        %v1518 = vpop.f32.mrf.mxu0
        %v1519 = vadd.f32 %v1481, %v1518
        %1520 = vmatmul.f32.gmra.mxu0 %v1404
        %v1521 = vpop.f32.mrf.mxu0
        %v1522 = vadd.f32 %v1481, %v1521
        %1523 = vmatmul.f32.gmra.mxu0 %v1405
        %v1524 = vpop.f32.mrf.mxu0
        %v1525 = vadd.f32 %v1481, %v1524
        %1526 = vmatmul.f32.gmra.mxu0 %v1406
        %v1527 = vpop.f32.mrf.mxu0
        %v1528 = vadd.f32 %v1481, %v1527
        %1529 = vmatmul.f32.gmra.mxu0 %v1407
        %v1530 = vpop.f32.mrf.mxu0
        %v1531 = vadd.f32 %v1481, %v1530
        %1532 = vmatmul.f32.gmra.mxu0 %v1408
        %v1533 = vpop.f32.mrf.mxu0
        %v1534 = vadd.f32 %v1481, %v1533
        %1535 = vmatmul.f32.gmra.mxu0 %v1409
        %v1536 = vpop.f32.mrf.mxu0
        %v1537 = vadd.f32 %v1481, %v1536
        %1538 = vmatmul.f32.gmra.mxu0 %v1410
        %v1539 = vpop.f32.mrf.mxu0
        %v1540 = vadd.f32 %v1481, %v1539
        %1541 = vmatmul.f32.gmra.mxu0 %v1411
        %v1542 = vpop.f32.mrf.mxu0
        %v1543 = vadd.f32 %v1481, %v1542
        %1544 = vmatmul.f32.gmra.mxu0 %v1412
        %v1545 = vpop.f32.mrf.mxu0
        %v1546 = vadd.f32 %v1481, %v1545
        %1547 = vmatmul.f32.gmra.mxu0 %v1413
        %v1548 = vpop.f32.mrf.mxu0
        %v1549 = vadd.f32 %v1481, %v1548
        %1550 = vmatmul.f32.gmra.mxu0 %v1414
        %v1551 = vpop.f32.mrf.mxu0
        %v1552 = vadd.f32 %v1481, %v1551
        %1553 = vmatmul.f32.gmra.mxu0 %v1415
        %v1554 = vpop.f32.mrf.mxu0
        %v1555 = vadd.f32 %v1481, %v1554
        %1556 = vmatmul.f32.gmra.mxu0 %v1416
        %v1557 = vpop.f32.mrf.mxu0
        %v1558 = vadd.f32 %v1481, %v1557
        %1559 = vmatmul.f32.gmra.mxu0 %v1417
        %v1560 = vpop.f32.mrf.mxu0
        %v1561 = vadd.f32 %v1481, %v1560
        %1562 = vmatmul.f32.gmra.mxu0 %v1418
        %v1563 = vpop.f32.mrf.mxu0
        %v1564 = vadd.f32 %v1481, %v1563
        %1565 = vmatmul.f32.gmra.mxu0 %v1419
        %v1566 = vpop.f32.mrf.mxu0
        %v1567 = vadd.f32 %v1481, %v1566
        %1568 = vmatmul.f32.gmra.mxu0 %v1420
        %v1569 = vpop.f32.mrf.mxu0
        %v1570 = vadd.f32 %v1481, %v1569
        %1571 = vmatmul.f32.gmra.mxu0 %v1421
        %v1572 = vpop.f32.mrf.mxu0
        %v1573 = vadd.f32 %v1481, %v1572
        %1574 = vmatmul.f32.gmra.mxu0 %v1422
        %v1575 = vpop.f32.mrf.mxu0
        %v1576 = vadd.f32 %v1481, %v1575
        %1577 = vmatmul.f32.gmra.mxu0 %v1423
        %v1578 = vpop.f32.mrf.mxu0
        %v1579 = vadd.f32 %v1481, %v1578
        %1580 = vmatmul.f32.gmra.mxu0 %v1424
        %v1581 = vpop.f32.mrf.mxu0
        %v1582 = vadd.f32 %v1481, %v1581
        %1583 = vmatmul.f32.gmra.mxu0 %v1425
        %v1584 = vpop.f32.mrf.mxu0
        %v1585 = vadd.f32 %v1481, %v1584
        %1586 = vmatmul.f32.gmra.mxu0 %v1426
        %v1587 = vpop.f32.mrf.mxu0
        %v1588 = vadd.f32 %v1481, %v1587
        %1589 = vmatmul.f32.gmra.mxu0 %v1427
        %v1590 = vpop.f32.mrf.mxu0
        %v1591 = vadd.f32 %v1481, %v1590
        %1592 = vmatmul.f32.gmra.mxu0 %v1428
        %v1593 = vpop.f32.mrf.mxu0
        %v1594 = vadd.f32 %v1481, %v1593
        %1595 = vmatmul.f32.gmra.mxu0 %v1429
        %v1596 = vpop.f32.mrf.mxu0
        %v1597 = vadd.f32 %v1481, %v1596
        %1598 = vmatmul.f32.gmra.mxu0 %v1430
        %v1599 = vpop.f32.mrf.mxu0
        %v1600 = vadd.f32 %v1481, %v1599
        %1601 = vmatmul.f32.gmra.mxu0 %v1431
        %v1602 = vpop.f32.mrf.mxu0
        %v1603 = vadd.f32 %v1481, %v1602
        %1604 = vmatmul.f32.gmra.mxu0 %v1432
        %v1605 = vpop.f32.mrf.mxu0
        %v1606 = vadd.f32 %v1481, %v1605
        %1607 = vmatmul.f32.gmra.mxu0 %v1433
        %v1608 = vpop.f32.mrf.mxu0
        %v1609 = vadd.f32 %v1481, %v1608
        %1610 = vmatmul.f32.gmra.mxu0 %v1434
        %v1611 = vpop.f32.mrf.mxu0
        %v1612 = vadd.f32 %v1481, %v1611
        %1613 = vmatmul.f32.gmra.mxu0 %v1435
        %v1614 = vpop.f32.mrf.mxu0
        %v1615 = vadd.f32 %v1481, %v1614
        %1616 = vmatmul.f32.gmra.mxu0 %v1436
        %v1617 = vpop.f32.mrf.mxu0
        %v1618 = vadd.f32 %v1481, %v1617
        %1619 = vmatmul.f32.gmra.mxu0 %v1437
        %v1620 = vpop.f32.mrf.mxu0
        %v1621 = vadd.f32 %v1481, %v1620
        %1622 = vmatmul.f32.gmra.mxu0 %v1438
        %v1623 = vpop.f32.mrf.mxu0
        %v1624 = vadd.f32 %v1481, %v1623
        %1625 = vmatmul.f32.gmra.mxu0 %v1439
        %v1626 = vpop.f32.mrf.mxu0
        %v1627 = vadd.f32 %v1481, %v1626
        %1628 = vmatmul.f32.gmra.mxu0 %v1440
        %v1629 = vpop.f32.mrf.mxu0
        %v1630 = vadd.f32 %v1481, %v1629
        %1631 = vmatmul.f32.gmra.mxu0 %v1441
        %v1632 = vpop.f32.mrf.mxu0
        %v1633 = vadd.f32 %v1481, %v1632
        %1634 = vmatmul.f32.gmra.mxu0 %v1442
        %v1635 = vpop.f32.mrf.mxu0
        %v1636 = vadd.f32 %v1481, %v1635
        %1637 = vmatmul.f32.gmra.mxu0 %v1443
        %v1638 = vpop.f32.mrf.mxu0
        %v1639 = vadd.f32 %v1481, %v1638
        %1640 = vmatmul.f32.gmra.mxu0 %v1444
        %v1641 = vpop.f32.mrf.mxu0
        %v1642 = vadd.f32 %v1481, %v1641
        %1643 = vmatmul.f32.gmra.mxu0 %v1445
        %v1644 = vpop.f32.mrf.mxu0
        %v1645 = vadd.f32 %v1481, %v1644
        %1646 = vmatmul.f32.gmra.mxu0 %v1446
        %v1647 = vpop.f32.mrf.mxu0
        %v1648 = vadd.f32 %v1481, %v1647
        %1649 = vmatmul.f32.gmra.mxu0 %v1447
        %v1650 = vpop.f32.mrf.mxu0
        %v1651 = vadd.f32 %v1481, %v1650
        %1652 = vmatmul.f32.gmra.mxu0 %v1448
        %v1653 = vpop.f32.mrf.mxu0
        %v1654 = vadd.f32 %v1481, %v1653
        %1655 = vmatmul.f32.gmra.mxu0 %v1449
        %v1656 = vpop.f32.mrf.mxu0
        %v1657 = vadd.f32 %v1481, %v1656
        %1658 = vmatmul.f32.gmra.mxu0 %v1450
        %v1659 = vpop.f32.mrf.mxu0
        %v1660 = vadd.f32 %v1481, %v1659
        %1661 = vmatmul.f32.gmra.mxu0 %v1451
        %v1662 = vpop.f32.mrf.mxu0
        %v1663 = vadd.f32 %v1481, %v1662
        %1664 = vmatmul.f32.gmra.mxu0 %v1452
        %v1665 = vpop.f32.mrf.mxu0
        %v1666 = vadd.f32 %v1481, %v1665
        %1667 = vmatmul.f32.gmra.mxu0 %v1453
        %v1668 = vpop.f32.mrf.mxu0
        %v1669 = vadd.f32 %v1481, %v1668
        %1670 = vmatmul.f32.gmra.mxu0 %v1454
        %v1671 = vpop.f32.mrf.mxu0
        %v1672 = vadd.f32 %v1481, %v1671
        %1673 = vmatmul.f32.gmra.mxu0 %v1455
        %v1674 = vpop.f32.mrf.mxu0
        %v1675 = vadd.f32 %v1481, %v1674
        %1676 = vmatmul.f32.gmra.mxu0 %v1456
        %v1677 = vpop.f32.mrf.mxu0
        %v1678 = vadd.f32 %v1481, %v1677
        %1679 = vmatmul.f32.gmra.mxu0 %v1457
        %v1680 = vpop.f32.mrf.mxu0
        %v1681 = vadd.f32 %v1481, %v1680
        %1682 = vmatmul.f32.gmra.mxu0 %v1458
        %v1683 = vpop.f32.mrf.mxu0
        %v1684 = vadd.f32 %v1481, %v1683
        %1685 = vmatmul.f32.gmra.mxu0 %v1459
        %v1686 = vpop.f32.mrf.mxu0
        %v1687 = vadd.f32 %v1481, %v1686
        %1688 = vmatmul.f32.gmra.mxu0 %v1460
        %v1689 = vpop.f32.mrf.mxu0
        %v1690 = vadd.f32 %v1481, %v1689
        %1691 = vdwg.mxu0
        %v1692 = vtanh.pop %v1501
        %v1693 = vtanh.pop %v1504
        %v1694 = vtanh.pop %v1507
        %v1695 = vtanh.pop %v1510
        %v1696 = vtanh.pop %v1513
        %v1697 = vtanh.pop %v1516
        %v1698 = vtanh.pop %v1519
        %v1699 = vtanh.pop %v1522
        %v1700 = vtanh.pop %v1525
        %v1701 = vtanh.pop %v1528
        %v1702 = vtanh.pop %v1531
        %v1703 = vtanh.pop %v1534
        %v1704 = vtanh.pop %v1537
        %v1705 = vtanh.pop %v1540
        %v1706 = vtanh.pop %v1543
        %v1707 = vtanh.pop %v1546
        %v1708 = vtanh.pop %v1549
        %v1709 = vtanh.pop %v1552
        %v1710 = vtanh.pop %v1555
        %v1711 = vtanh.pop %v1558
        %v1712 = vtanh.pop %v1561
        %v1713 = vtanh.pop %v1564
        %v1714 = vtanh.pop %v1567
        %v1715 = vtanh.pop %v1570
        %v1716 = vtanh.pop %v1573
        %v1717 = vtanh.pop %v1576
        %v1718 = vtanh.pop %v1579
        %v1719 = vtanh.pop %v1582
        %v1720 = vtanh.pop %v1585
        %v1721 = vtanh.pop %v1588
        %v1722 = vtanh.pop %v1591
        %v1723 = vtanh.pop %v1594
        %v1724 = vtanh.pop %v1597
        %v1725 = vtanh.pop %v1600
        %v1726 = vtanh.pop %v1603
        %v1727 = vtanh.pop %v1606
        %v1728 = vtanh.pop %v1609
        %v1729 = vtanh.pop %v1612
        %v1730 = vtanh.pop %v1615
        %v1731 = vtanh.pop %v1618
        %v1732 = vtanh.pop %v1621
        %v1733 = vtanh.pop %v1624
        %v1734 = vtanh.pop %v1627
        %v1735 = vtanh.pop %v1630
        %v1736 = vtanh.pop %v1633
        %v1737 = vtanh.pop %v1636
        %v1738 = vtanh.pop %v1639
        %v1739 = vtanh.pop %v1642
        %v1740 = vtanh.pop %v1645
        %v1741 = vtanh.pop %v1648
        %v1742 = vtanh.pop %v1651
        %v1743 = vtanh.pop %v1654
        %v1744 = vtanh.pop %v1657
        %v1745 = vtanh.pop %v1660
        %v1746 = vtanh.pop %v1663
        %v1747 = vtanh.pop %v1666
        %v1748 = vtanh.pop %v1669
        %v1749 = vtanh.pop %v1672
        %v1750 = vtanh.pop %v1675
        %v1751 = vtanh.pop %v1678
        %v1752 = vtanh.pop %v1681
        %v1753 = vtanh.pop %v1684
        %v1754 = vtanh.pop %v1687
        %v1755 = vtanh.pop %v1690
        %s1756 = scalar_lea.vmem %s2, 256
        %v1757 = vld [vmem:[%s1756] sm:$0xff]
        %v1758 = vld [vmem:[%s1756 + $0x8] sm:$0xff]
        %v1759 = vld [vmem:[%s1756 + $0x10] sm:$0xff]
        %v1760 = vld [vmem:[%s1756 + $0x18] sm:$0xff]
        %v1761 = vld [vmem:[%s1756 + $0x20] sm:$0xff]
        %v1762 = vld [vmem:[%s1756 + $0x28] sm:$0xff]
        %v1763 = vld [vmem:[%s1756 + $0x30] sm:$0xff]
        %v1764 = vld [vmem:[%s1756 + $0x38] sm:$0xff]
        %v1765 = vld [vmem:[%s1756 + $0x40] sm:$0xff]
        %v1766 = vld [vmem:[%s1756 + $0x48] sm:$0xff]
        %v1767 = vld [vmem:[%s1756 + $0x50] sm:$0xff]
        %v1768 = vld [vmem:[%s1756 + $0x58] sm:$0xff]
        %v1769 = vld [vmem:[%s1756 + $0x60] sm:$0xff]
        %v1770 = vld [vmem:[%s1756 + $0x68] sm:$0xff]
        %v1771 = vld [vmem:[%s1756 + $0x70] sm:$0xff]
        %v1772 = vld [vmem:[%s1756 + $0x78] sm:$0xff]
        %s1773 = scalar_lea.vmem %s3, 3
        %v1774 = vld [vmem:[%s1773] sm:$0x1]
        %v1776 = vperm.slane %v1774, 0
        %1778 = vmatpush.msra.mxu0 %v1772
        %1779 = vmatpush.msra.mxu0 %v1771
        %1780 = vmatpush.msra.mxu0 %v1770
        %1781 = vmatpush.msra.mxu0 %v1769
        %1782 = vmatpush.msra.mxu0 %v1768
        %1783 = vmatpush.msra.mxu0 %v1767
        %1784 = vmatpush.msra.mxu0 %v1766
        %1785 = vmatpush.msra.mxu0 %v1765
        %1786 = vmatpush.msra.mxu0 %v1764
        %1787 = vmatpush.msra.mxu0 %v1763
        %1788 = vmatpush.msra.mxu0 %v1762
        %1789 = vmatpush.msra.mxu0 %v1761
        %1790 = vmatpush.msra.mxu0 %v1760
        %1791 = vmatpush.msra.mxu0 %v1759
        %1792 = vmatpush.msra.mxu0 %v1758
        %1793 = vmatpush.msra.mxu0 %v1757
        %1794 = vmatmul.f32.gmra.mxu0 %v1692
        %v1795 = vpop.f32.mrf.mxu0
        %v1796 = vadd.f32 %v1776, %v1795
        %1797 = vmatmul.f32.gmra.mxu0 %v1693
        %v1798 = vpop.f32.mrf.mxu0
        %v1799 = vadd.f32 %v1776, %v1798
        %1800 = vmatmul.f32.gmra.mxu0 %v1694
        %v1801 = vpop.f32.mrf.mxu0
        %v1802 = vadd.f32 %v1776, %v1801
        %1803 = vmatmul.f32.gmra.mxu0 %v1695
        %v1804 = vpop.f32.mrf.mxu0
        %v1805 = vadd.f32 %v1776, %v1804
        %1806 = vmatmul.f32.gmra.mxu0 %v1696
        %v1807 = vpop.f32.mrf.mxu0
        %v1808 = vadd.f32 %v1776, %v1807
        %1809 = vmatmul.f32.gmra.mxu0 %v1697
        %v1810 = vpop.f32.mrf.mxu0
        %v1811 = vadd.f32 %v1776, %v1810
        %1812 = vmatmul.f32.gmra.mxu0 %v1698
        %v1813 = vpop.f32.mrf.mxu0
        %v1814 = vadd.f32 %v1776, %v1813
        %1815 = vmatmul.f32.gmra.mxu0 %v1699
        %v1816 = vpop.f32.mrf.mxu0
        %v1817 = vadd.f32 %v1776, %v1816
        %1818 = vmatmul.f32.gmra.mxu0 %v1700
        %v1819 = vpop.f32.mrf.mxu0
        %v1820 = vadd.f32 %v1776, %v1819
        %1821 = vmatmul.f32.gmra.mxu0 %v1701
        %v1822 = vpop.f32.mrf.mxu0
        %v1823 = vadd.f32 %v1776, %v1822
        %1824 = vmatmul.f32.gmra.mxu0 %v1702
        %v1825 = vpop.f32.mrf.mxu0
        %v1826 = vadd.f32 %v1776, %v1825
        %1827 = vmatmul.f32.gmra.mxu0 %v1703
        %v1828 = vpop.f32.mrf.mxu0
        %v1829 = vadd.f32 %v1776, %v1828
        %1830 = vmatmul.f32.gmra.mxu0 %v1704
        %v1831 = vpop.f32.mrf.mxu0
        %v1832 = vadd.f32 %v1776, %v1831
        %1833 = vmatmul.f32.gmra.mxu0 %v1705
        %v1834 = vpop.f32.mrf.mxu0
        %v1835 = vadd.f32 %v1776, %v1834
        %1836 = vmatmul.f32.gmra.mxu0 %v1706
        %v1837 = vpop.f32.mrf.mxu0
        %v1838 = vadd.f32 %v1776, %v1837
        %1839 = vmatmul.f32.gmra.mxu0 %v1707
        %v1840 = vpop.f32.mrf.mxu0
        %v1841 = vadd.f32 %v1776, %v1840
        %1842 = vmatmul.f32.gmra.mxu0 %v1708
        %v1843 = vpop.f32.mrf.mxu0
        %v1844 = vadd.f32 %v1776, %v1843
        %1845 = vmatmul.f32.gmra.mxu0 %v1709
        %v1846 = vpop.f32.mrf.mxu0
        %v1847 = vadd.f32 %v1776, %v1846
        %1848 = vmatmul.f32.gmra.mxu0 %v1710
        %v1849 = vpop.f32.mrf.mxu0
        %v1850 = vadd.f32 %v1776, %v1849
        %1851 = vmatmul.f32.gmra.mxu0 %v1711
        %v1852 = vpop.f32.mrf.mxu0
        %v1853 = vadd.f32 %v1776, %v1852
        %1854 = vmatmul.f32.gmra.mxu0 %v1712
        %v1855 = vpop.f32.mrf.mxu0
        %v1856 = vadd.f32 %v1776, %v1855
        %1857 = vmatmul.f32.gmra.mxu0 %v1713
        %v1858 = vpop.f32.mrf.mxu0
        %v1859 = vadd.f32 %v1776, %v1858
        %1860 = vmatmul.f32.gmra.mxu0 %v1714
        %v1861 = vpop.f32.mrf.mxu0
        %v1862 = vadd.f32 %v1776, %v1861
        %1863 = vmatmul.f32.gmra.mxu0 %v1715
        %v1864 = vpop.f32.mrf.mxu0
        %v1865 = vadd.f32 %v1776, %v1864
        %1866 = vmatmul.f32.gmra.mxu0 %v1716
        %v1867 = vpop.f32.mrf.mxu0
        %v1868 = vadd.f32 %v1776, %v1867
        %1869 = vmatmul.f32.gmra.mxu0 %v1717
        %v1870 = vpop.f32.mrf.mxu0
        %v1871 = vadd.f32 %v1776, %v1870
        %1872 = vmatmul.f32.gmra.mxu0 %v1718
        %v1873 = vpop.f32.mrf.mxu0
        %v1874 = vadd.f32 %v1776, %v1873
        %1875 = vmatmul.f32.gmra.mxu0 %v1719
        %v1876 = vpop.f32.mrf.mxu0
        %v1877 = vadd.f32 %v1776, %v1876
        %1878 = vmatmul.f32.gmra.mxu0 %v1720
        %v1879 = vpop.f32.mrf.mxu0
        %v1880 = vadd.f32 %v1776, %v1879
        %1881 = vmatmul.f32.gmra.mxu0 %v1721
        %v1882 = vpop.f32.mrf.mxu0
        %v1883 = vadd.f32 %v1776, %v1882
        %1884 = vmatmul.f32.gmra.mxu0 %v1722
        %v1885 = vpop.f32.mrf.mxu0
        %v1886 = vadd.f32 %v1776, %v1885
        %1887 = vmatmul.f32.gmra.mxu0 %v1723
        %v1888 = vpop.f32.mrf.mxu0
        %v1889 = vadd.f32 %v1776, %v1888
        %1890 = vmatmul.f32.gmra.mxu0 %v1724
        %v1891 = vpop.f32.mrf.mxu0
        %v1892 = vadd.f32 %v1776, %v1891
        %1893 = vmatmul.f32.gmra.mxu0 %v1725
        %v1894 = vpop.f32.mrf.mxu0
        %v1895 = vadd.f32 %v1776, %v1894
        %1896 = vmatmul.f32.gmra.mxu0 %v1726
        %v1897 = vpop.f32.mrf.mxu0
        %v1898 = vadd.f32 %v1776, %v1897
        %1899 = vmatmul.f32.gmra.mxu0 %v1727
        %v1900 = vpop.f32.mrf.mxu0
        %v1901 = vadd.f32 %v1776, %v1900
        %1902 = vmatmul.f32.gmra.mxu0 %v1728
        %v1903 = vpop.f32.mrf.mxu0
        %v1904 = vadd.f32 %v1776, %v1903
        %1905 = vmatmul.f32.gmra.mxu0 %v1729
        %v1906 = vpop.f32.mrf.mxu0
        %v1907 = vadd.f32 %v1776, %v1906
        %1908 = vmatmul.f32.gmra.mxu0 %v1730
        %v1909 = vpop.f32.mrf.mxu0
        %v1910 = vadd.f32 %v1776, %v1909
        %1911 = vmatmul.f32.gmra.mxu0 %v1731
        %v1912 = vpop.f32.mrf.mxu0
        %v1913 = vadd.f32 %v1776, %v1912
        %1914 = vmatmul.f32.gmra.mxu0 %v1732
        %v1915 = vpop.f32.mrf.mxu0
        %v1916 = vadd.f32 %v1776, %v1915
        %1917 = vmatmul.f32.gmra.mxu0 %v1733
        %v1918 = vpop.f32.mrf.mxu0
        %v1919 = vadd.f32 %v1776, %v1918
        %1920 = vmatmul.f32.gmra.mxu0 %v1734
        %v1921 = vpop.f32.mrf.mxu0
        %v1922 = vadd.f32 %v1776, %v1921
        %1923 = vmatmul.f32.gmra.mxu0 %v1735
        %v1924 = vpop.f32.mrf.mxu0
        %v1925 = vadd.f32 %v1776, %v1924
        %1926 = vmatmul.f32.gmra.mxu0 %v1736
        %v1927 = vpop.f32.mrf.mxu0
        %v1928 = vadd.f32 %v1776, %v1927
        %1929 = vmatmul.f32.gmra.mxu0 %v1737
        %v1930 = vpop.f32.mrf.mxu0
        %v1931 = vadd.f32 %v1776, %v1930
        %1932 = vmatmul.f32.gmra.mxu0 %v1738
        %v1933 = vpop.f32.mrf.mxu0
        %v1934 = vadd.f32 %v1776, %v1933
        %1935 = vmatmul.f32.gmra.mxu0 %v1739
        %v1936 = vpop.f32.mrf.mxu0
        %v1937 = vadd.f32 %v1776, %v1936
        %1938 = vmatmul.f32.gmra.mxu0 %v1740
        %v1939 = vpop.f32.mrf.mxu0
        %v1940 = vadd.f32 %v1776, %v1939
        %1941 = vmatmul.f32.gmra.mxu0 %v1741
        %v1942 = vpop.f32.mrf.mxu0
        %v1943 = vadd.f32 %v1776, %v1942
        %1944 = vmatmul.f32.gmra.mxu0 %v1742
        %v1945 = vpop.f32.mrf.mxu0
        %v1946 = vadd.f32 %v1776, %v1945
        %1947 = vmatmul.f32.gmra.mxu0 %v1743
        %v1948 = vpop.f32.mrf.mxu0
        %v1949 = vadd.f32 %v1776, %v1948
        %1950 = vmatmul.f32.gmra.mxu0 %v1744
        %v1951 = vpop.f32.mrf.mxu0
        %v1952 = vadd.f32 %v1776, %v1951
        %1953 = vmatmul.f32.gmra.mxu0 %v1745
        %v1954 = vpop.f32.mrf.mxu0
        %v1955 = vadd.f32 %v1776, %v1954
        %1956 = vmatmul.f32.gmra.mxu0 %v1746
        %v1957 = vpop.f32.mrf.mxu0
        %v1958 = vadd.f32 %v1776, %v1957
        %1959 = vmatmul.f32.gmra.mxu0 %v1747
        %v1960 = vpop.f32.mrf.mxu0
        %v1961 = vadd.f32 %v1776, %v1960
        %1962 = vmatmul.f32.gmra.mxu0 %v1748
        %v1963 = vpop.f32.mrf.mxu0
        %v1964 = vadd.f32 %v1776, %v1963
        %1965 = vmatmul.f32.gmra.mxu0 %v1749
        %v1966 = vpop.f32.mrf.mxu0
        %v1967 = vadd.f32 %v1776, %v1966
        %1968 = vmatmul.f32.gmra.mxu0 %v1750
        %v1969 = vpop.f32.mrf.mxu0
        %v1970 = vadd.f32 %v1776, %v1969
        %1971 = vmatmul.f32.gmra.mxu0 %v1751
        %v1972 = vpop.f32.mrf.mxu0
        %v1973 = vadd.f32 %v1776, %v1972
        %1974 = vmatmul.f32.gmra.mxu0 %v1752
        %v1975 = vpop.f32.mrf.mxu0
        %v1976 = vadd.f32 %v1776, %v1975
        %1977 = vmatmul.f32.gmra.mxu0 %v1753
        %v1978 = vpop.f32.mrf.mxu0
        %v1979 = vadd.f32 %v1776, %v1978
        %1980 = vmatmul.f32.gmra.mxu0 %v1754
        %v1981 = vpop.f32.mrf.mxu0
        %v1982 = vadd.f32 %v1776, %v1981
        %1983 = vmatmul.f32.gmra.mxu0 %v1755
        %v1984 = vpop.f32.mrf.mxu0
        %v1985 = vadd.f32 %v1776, %v1984
        %1986 = vdwg.mxu0
        %v1987 = vtanh.pop %v1796
        %v1988 = vtanh.pop %v1799
        %v1989 = vtanh.pop %v1802
        %v1990 = vtanh.pop %v1805
        %v1991 = vtanh.pop %v1808
        %v1992 = vtanh.pop %v1811
        %v1993 = vtanh.pop %v1814
        %v1994 = vtanh.pop %v1817
        %v1995 = vtanh.pop %v1820
        %v1996 = vtanh.pop %v1823
        %v1997 = vtanh.pop %v1826
        %v1998 = vtanh.pop %v1829
        %v1999 = vtanh.pop %v1832
        %v2000 = vtanh.pop %v1835
        %v2001 = vtanh.pop %v1838
        %v2002 = vtanh.pop %v1841
        %v2003 = vtanh.pop %v1844
        %v2004 = vtanh.pop %v1847
        %v2005 = vtanh.pop %v1850
        %v2006 = vtanh.pop %v1853
        %v2007 = vtanh.pop %v1856
        %v2008 = vtanh.pop %v1859
        %v2009 = vtanh.pop %v1862
        %v2010 = vtanh.pop %v1865
        %v2011 = vtanh.pop %v1868
        %v2012 = vtanh.pop %v1871
        %v2013 = vtanh.pop %v1874
        %v2014 = vtanh.pop %v1877
        %v2015 = vtanh.pop %v1880
        %v2016 = vtanh.pop %v1883
        %v2017 = vtanh.pop %v1886
        %v2018 = vtanh.pop %v1889
        %v2019 = vtanh.pop %v1892
        %v2020 = vtanh.pop %v1895
        %v2021 = vtanh.pop %v1898
        %v2022 = vtanh.pop %v1901
        %v2023 = vtanh.pop %v1904
        %v2024 = vtanh.pop %v1907
        %v2025 = vtanh.pop %v1910
        %v2026 = vtanh.pop %v1913
        %v2027 = vtanh.pop %v1916
        %v2028 = vtanh.pop %v1919
        %v2029 = vtanh.pop %v1922
        %v2030 = vtanh.pop %v1925
        %v2031 = vtanh.pop %v1928
        %v2032 = vtanh.pop %v1931
        %v2033 = vtanh.pop %v1934
        %v2034 = vtanh.pop %v1937
        %v2035 = vtanh.pop %v1940
        %v2036 = vtanh.pop %v1943
        %v2037 = vtanh.pop %v1946
        %v2038 = vtanh.pop %v1949
        %v2039 = vtanh.pop %v1952
        %v2040 = vtanh.pop %v1955
        %v2041 = vtanh.pop %v1958
        %v2042 = vtanh.pop %v1961
        %v2043 = vtanh.pop %v1964
        %v2044 = vtanh.pop %v1967
        %v2045 = vtanh.pop %v1970
        %v2046 = vtanh.pop %v1973
        %v2047 = vtanh.pop %v1976
        %v2048 = vtanh.pop %v1979
        %v2049 = vtanh.pop %v1982
        %v2050 = vtanh.pop %v1985
        %s2051 = scalar_lea.vmem %s2, 384
        %v2052 = vld [vmem:[%s2051] sm:$0xff]
        %v2053 = vld [vmem:[%s2051 + $0x8] sm:$0xff]
        %v2054 = vld [vmem:[%s2051 + $0x10] sm:$0xff]
        %v2055 = vld [vmem:[%s2051 + $0x18] sm:$0xff]
        %v2056 = vld [vmem:[%s2051 + $0x20] sm:$0xff]
        %v2057 = vld [vmem:[%s2051 + $0x28] sm:$0xff]
        %v2058 = vld [vmem:[%s2051 + $0x30] sm:$0xff]
        %v2059 = vld [vmem:[%s2051 + $0x38] sm:$0xff]
        %v2060 = vld [vmem:[%s2051 + $0x40] sm:$0xff]
        %v2061 = vld [vmem:[%s2051 + $0x48] sm:$0xff]
        %v2062 = vld [vmem:[%s2051 + $0x50] sm:$0xff]
        %v2063 = vld [vmem:[%s2051 + $0x58] sm:$0xff]
        %v2064 = vld [vmem:[%s2051 + $0x60] sm:$0xff]
        %v2065 = vld [vmem:[%s2051 + $0x68] sm:$0xff]
        %v2066 = vld [vmem:[%s2051 + $0x70] sm:$0xff]
        %v2067 = vld [vmem:[%s2051 + $0x78] sm:$0xff]
        %s2068 = scalar_lea.vmem %s3, 4
        %v2069 = vld [vmem:[%s2068] sm:$0x1]
        %v2071 = vperm.slane %v2069, 0
        %2073 = vmatpush.msra.mxu0 %v2067
        %2074 = vmatpush.msra.mxu0 %v2066
        %2075 = vmatpush.msra.mxu0 %v2065
        %2076 = vmatpush.msra.mxu0 %v2064
        %2077 = vmatpush.msra.mxu0 %v2063
        %2078 = vmatpush.msra.mxu0 %v2062
        %2079 = vmatpush.msra.mxu0 %v2061
        %2080 = vmatpush.msra.mxu0 %v2060
        %2081 = vmatpush.msra.mxu0 %v2059
        %2082 = vmatpush.msra.mxu0 %v2058
        %2083 = vmatpush.msra.mxu0 %v2057
        %2084 = vmatpush.msra.mxu0 %v2056
        %2085 = vmatpush.msra.mxu0 %v2055
        %2086 = vmatpush.msra.mxu0 %v2054
        %2087 = vmatpush.msra.mxu0 %v2053
        %2088 = vmatpush.msra.mxu0 %v2052
        %2089 = vmatmul.f32.gmra.mxu0 %v1987
        %v2090 = vpop.f32.mrf.mxu0
        %v2091 = vadd.f32 %v2071, %v2090
        %2092 = vmatmul.f32.gmra.mxu0 %v1988
        %v2093 = vpop.f32.mrf.mxu0
        %v2094 = vadd.f32 %v2071, %v2093
        %2095 = vmatmul.f32.gmra.mxu0 %v1989
        %v2096 = vpop.f32.mrf.mxu0
        %v2097 = vadd.f32 %v2071, %v2096
        %2098 = vmatmul.f32.gmra.mxu0 %v1990
        %v2099 = vpop.f32.mrf.mxu0
        %v2100 = vadd.f32 %v2071, %v2099
        %2101 = vmatmul.f32.gmra.mxu0 %v1991
        %v2102 = vpop.f32.mrf.mxu0
        %v2103 = vadd.f32 %v2071, %v2102
        %2104 = vmatmul.f32.gmra.mxu0 %v1992
        %v2105 = vpop.f32.mrf.mxu0
        %v2106 = vadd.f32 %v2071, %v2105
        %2107 = vmatmul.f32.gmra.mxu0 %v1993
        %v2108 = vpop.f32.mrf.mxu0
        %v2109 = vadd.f32 %v2071, %v2108
        %2110 = vmatmul.f32.gmra.mxu0 %v1994
        %v2111 = vpop.f32.mrf.mxu0
        %v2112 = vadd.f32 %v2071, %v2111
        %2113 = vmatmul.f32.gmra.mxu0 %v1995
        %v2114 = vpop.f32.mrf.mxu0
        %v2115 = vadd.f32 %v2071, %v2114
        %2116 = vmatmul.f32.gmra.mxu0 %v1996
        %v2117 = vpop.f32.mrf.mxu0
        %v2118 = vadd.f32 %v2071, %v2117
        %2119 = vmatmul.f32.gmra.mxu0 %v1997
        %v2120 = vpop.f32.mrf.mxu0
        %v2121 = vadd.f32 %v2071, %v2120
        %2122 = vmatmul.f32.gmra.mxu0 %v1998
        %v2123 = vpop.f32.mrf.mxu0
        %v2124 = vadd.f32 %v2071, %v2123
        %2125 = vmatmul.f32.gmra.mxu0 %v1999
        %v2126 = vpop.f32.mrf.mxu0
        %v2127 = vadd.f32 %v2071, %v2126
        %2128 = vmatmul.f32.gmra.mxu0 %v2000
        %v2129 = vpop.f32.mrf.mxu0
        %v2130 = vadd.f32 %v2071, %v2129
        %2131 = vmatmul.f32.gmra.mxu0 %v2001
        %v2132 = vpop.f32.mrf.mxu0
        %v2133 = vadd.f32 %v2071, %v2132
        %2134 = vmatmul.f32.gmra.mxu0 %v2002
        %v2135 = vpop.f32.mrf.mxu0
        %v2136 = vadd.f32 %v2071, %v2135
        %2137 = vmatmul.f32.gmra.mxu0 %v2003
        %v2138 = vpop.f32.mrf.mxu0
        %v2139 = vadd.f32 %v2071, %v2138
        %2140 = vmatmul.f32.gmra.mxu0 %v2004
        %v2141 = vpop.f32.mrf.mxu0
        %v2142 = vadd.f32 %v2071, %v2141
        %2143 = vmatmul.f32.gmra.mxu0 %v2005
        %v2144 = vpop.f32.mrf.mxu0
        %v2145 = vadd.f32 %v2071, %v2144
        %2146 = vmatmul.f32.gmra.mxu0 %v2006
        %v2147 = vpop.f32.mrf.mxu0
        %v2148 = vadd.f32 %v2071, %v2147
        %2149 = vmatmul.f32.gmra.mxu0 %v2007
        %v2150 = vpop.f32.mrf.mxu0
        %v2151 = vadd.f32 %v2071, %v2150
        %2152 = vmatmul.f32.gmra.mxu0 %v2008
        %v2153 = vpop.f32.mrf.mxu0
        %v2154 = vadd.f32 %v2071, %v2153
        %2155 = vmatmul.f32.gmra.mxu0 %v2009
        %v2156 = vpop.f32.mrf.mxu0
        %v2157 = vadd.f32 %v2071, %v2156
        %2158 = vmatmul.f32.gmra.mxu0 %v2010
        %v2159 = vpop.f32.mrf.mxu0
        %v2160 = vadd.f32 %v2071, %v2159
        %2161 = vmatmul.f32.gmra.mxu0 %v2011
        %v2162 = vpop.f32.mrf.mxu0
        %v2163 = vadd.f32 %v2071, %v2162
        %2164 = vmatmul.f32.gmra.mxu0 %v2012
        %v2165 = vpop.f32.mrf.mxu0
        %v2166 = vadd.f32 %v2071, %v2165
        %2167 = vmatmul.f32.gmra.mxu0 %v2013
        %v2168 = vpop.f32.mrf.mxu0
        %v2169 = vadd.f32 %v2071, %v2168
        %2170 = vmatmul.f32.gmra.mxu0 %v2014
        %v2171 = vpop.f32.mrf.mxu0
        %v2172 = vadd.f32 %v2071, %v2171
        %2173 = vmatmul.f32.gmra.mxu0 %v2015
        %v2174 = vpop.f32.mrf.mxu0
        %v2175 = vadd.f32 %v2071, %v2174
        %2176 = vmatmul.f32.gmra.mxu0 %v2016
        %v2177 = vpop.f32.mrf.mxu0
        %v2178 = vadd.f32 %v2071, %v2177
        %2179 = vmatmul.f32.gmra.mxu0 %v2017
        %v2180 = vpop.f32.mrf.mxu0
        %v2181 = vadd.f32 %v2071, %v2180
        %2182 = vmatmul.f32.gmra.mxu0 %v2018
        %v2183 = vpop.f32.mrf.mxu0
        %v2184 = vadd.f32 %v2071, %v2183
        %2185 = vmatmul.f32.gmra.mxu0 %v2019
        %v2186 = vpop.f32.mrf.mxu0
        %v2187 = vadd.f32 %v2071, %v2186
        %2188 = vmatmul.f32.gmra.mxu0 %v2020
        %v2189 = vpop.f32.mrf.mxu0
        %v2190 = vadd.f32 %v2071, %v2189
        %2191 = vmatmul.f32.gmra.mxu0 %v2021
        %v2192 = vpop.f32.mrf.mxu0
        %v2193 = vadd.f32 %v2071, %v2192
        %2194 = vmatmul.f32.gmra.mxu0 %v2022
        %v2195 = vpop.f32.mrf.mxu0
        %v2196 = vadd.f32 %v2071, %v2195
        %2197 = vmatmul.f32.gmra.mxu0 %v2023
        %v2198 = vpop.f32.mrf.mxu0
        %v2199 = vadd.f32 %v2071, %v2198
        %2200 = vmatmul.f32.gmra.mxu0 %v2024
        %v2201 = vpop.f32.mrf.mxu0
        %v2202 = vadd.f32 %v2071, %v2201
        %2203 = vmatmul.f32.gmra.mxu0 %v2025
        %v2204 = vpop.f32.mrf.mxu0
        %v2205 = vadd.f32 %v2071, %v2204
        %2206 = vmatmul.f32.gmra.mxu0 %v2026
        %v2207 = vpop.f32.mrf.mxu0
        %v2208 = vadd.f32 %v2071, %v2207
        %2209 = vmatmul.f32.gmra.mxu0 %v2027
        %v2210 = vpop.f32.mrf.mxu0
        %v2211 = vadd.f32 %v2071, %v2210
        %2212 = vmatmul.f32.gmra.mxu0 %v2028
        %v2213 = vpop.f32.mrf.mxu0
        %v2214 = vadd.f32 %v2071, %v2213
        %2215 = vmatmul.f32.gmra.mxu0 %v2029
        %v2216 = vpop.f32.mrf.mxu0
        %v2217 = vadd.f32 %v2071, %v2216
        %2218 = vmatmul.f32.gmra.mxu0 %v2030
        %v2219 = vpop.f32.mrf.mxu0
        %v2220 = vadd.f32 %v2071, %v2219
        %2221 = vmatmul.f32.gmra.mxu0 %v2031
        %v2222 = vpop.f32.mrf.mxu0
        %v2223 = vadd.f32 %v2071, %v2222
        %2224 = vmatmul.f32.gmra.mxu0 %v2032
        %v2225 = vpop.f32.mrf.mxu0
        %v2226 = vadd.f32 %v2071, %v2225
        %2227 = vmatmul.f32.gmra.mxu0 %v2033
        %v2228 = vpop.f32.mrf.mxu0
        %v2229 = vadd.f32 %v2071, %v2228
        %2230 = vmatmul.f32.gmra.mxu0 %v2034
        %v2231 = vpop.f32.mrf.mxu0
        %v2232 = vadd.f32 %v2071, %v2231
        %2233 = vmatmul.f32.gmra.mxu0 %v2035
        %v2234 = vpop.f32.mrf.mxu0
        %v2235 = vadd.f32 %v2071, %v2234
        %2236 = vmatmul.f32.gmra.mxu0 %v2036
        %v2237 = vpop.f32.mrf.mxu0
        %v2238 = vadd.f32 %v2071, %v2237
        %2239 = vmatmul.f32.gmra.mxu0 %v2037
        %v2240 = vpop.f32.mrf.mxu0
        %v2241 = vadd.f32 %v2071, %v2240
        %2242 = vmatmul.f32.gmra.mxu0 %v2038
        %v2243 = vpop.f32.mrf.mxu0
        %v2244 = vadd.f32 %v2071, %v2243
        %2245 = vmatmul.f32.gmra.mxu0 %v2039
        %v2246 = vpop.f32.mrf.mxu0
        %v2247 = vadd.f32 %v2071, %v2246
        %2248 = vmatmul.f32.gmra.mxu0 %v2040
        %v2249 = vpop.f32.mrf.mxu0
        %v2250 = vadd.f32 %v2071, %v2249
        %2251 = vmatmul.f32.gmra.mxu0 %v2041
        %v2252 = vpop.f32.mrf.mxu0
        %v2253 = vadd.f32 %v2071, %v2252
        %2254 = vmatmul.f32.gmra.mxu0 %v2042
        %v2255 = vpop.f32.mrf.mxu0
        %v2256 = vadd.f32 %v2071, %v2255
        %2257 = vmatmul.f32.gmra.mxu0 %v2043
        %v2258 = vpop.f32.mrf.mxu0
        %v2259 = vadd.f32 %v2071, %v2258
        %2260 = vmatmul.f32.gmra.mxu0 %v2044
        %v2261 = vpop.f32.mrf.mxu0
        %v2262 = vadd.f32 %v2071, %v2261
        %2263 = vmatmul.f32.gmra.mxu0 %v2045
        %v2264 = vpop.f32.mrf.mxu0
        %v2265 = vadd.f32 %v2071, %v2264
        %2266 = vmatmul.f32.gmra.mxu0 %v2046
        %v2267 = vpop.f32.mrf.mxu0
        %v2268 = vadd.f32 %v2071, %v2267
        %2269 = vmatmul.f32.gmra.mxu0 %v2047
        %v2270 = vpop.f32.mrf.mxu0
        %v2271 = vadd.f32 %v2071, %v2270
        %2272 = vmatmul.f32.gmra.mxu0 %v2048
        %v2273 = vpop.f32.mrf.mxu0
        %v2274 = vadd.f32 %v2071, %v2273
        %2275 = vmatmul.f32.gmra.mxu0 %v2049
        %v2276 = vpop.f32.mrf.mxu0
        %v2277 = vadd.f32 %v2071, %v2276
        %2278 = vmatmul.f32.gmra.mxu0 %v2050
        %v2279 = vpop.f32.mrf.mxu0
        %v2280 = vadd.f32 %v2071, %v2279
        %2281 = vdwg.mxu0
        %v2282 = vtanh.pop %v2091
        %v2283 = vtanh.pop %v2094
        %v2284 = vtanh.pop %v2097
        %v2285 = vtanh.pop %v2100
        %v2286 = vtanh.pop %v2103
        %v2287 = vtanh.pop %v2106
        %v2288 = vtanh.pop %v2109
        %v2289 = vtanh.pop %v2112
        %v2290 = vtanh.pop %v2115
        %v2291 = vtanh.pop %v2118
        %v2292 = vtanh.pop %v2121
        %v2293 = vtanh.pop %v2124
        %v2294 = vtanh.pop %v2127
        %v2295 = vtanh.pop %v2130
        %v2296 = vtanh.pop %v2133
        %v2297 = vtanh.pop %v2136
        %v2298 = vtanh.pop %v2139
        %v2299 = vtanh.pop %v2142
        %v2300 = vtanh.pop %v2145
        %v2301 = vtanh.pop %v2148
        %v2302 = vtanh.pop %v2151
        %v2303 = vtanh.pop %v2154
        %v2304 = vtanh.pop %v2157
        %v2305 = vtanh.pop %v2160
        %v2306 = vtanh.pop %v2163
        %v2307 = vtanh.pop %v2166
        %v2308 = vtanh.pop %v2169
        %v2309 = vtanh.pop %v2172
        %v2310 = vtanh.pop %v2175
        %v2311 = vtanh.pop %v2178
        %v2312 = vtanh.pop %v2181
        %v2313 = vtanh.pop %v2184
        %v2314 = vtanh.pop %v2187
        %v2315 = vtanh.pop %v2190
        %v2316 = vtanh.pop %v2193
        %v2317 = vtanh.pop %v2196
        %v2318 = vtanh.pop %v2199
        %v2319 = vtanh.pop %v2202
        %v2320 = vtanh.pop %v2205
        %v2321 = vtanh.pop %v2208
        %v2322 = vtanh.pop %v2211
        %v2323 = vtanh.pop %v2214
        %v2324 = vtanh.pop %v2217
        %v2325 = vtanh.pop %v2220
        %v2326 = vtanh.pop %v2223
        %v2327 = vtanh.pop %v2226
        %v2328 = vtanh.pop %v2229
        %v2329 = vtanh.pop %v2232
        %v2330 = vtanh.pop %v2235
        %v2331 = vtanh.pop %v2238
        %v2332 = vtanh.pop %v2241
        %v2333 = vtanh.pop %v2244
        %v2334 = vtanh.pop %v2247
        %v2335 = vtanh.pop %v2250
        %v2336 = vtanh.pop %v2253
        %v2337 = vtanh.pop %v2256
        %v2338 = vtanh.pop %v2259
        %v2339 = vtanh.pop %v2262
        %v2340 = vtanh.pop %v2265
        %v2341 = vtanh.pop %v2268
        %v2342 = vtanh.pop %v2271
        %v2343 = vtanh.pop %v2274
        %v2344 = vtanh.pop %v2277
        %v2345 = vtanh.pop %v2280
        %s2346 = scalar_lea.vmem %s2, 512
        %v2347 = vld [vmem:[%s2346] sm:$0xff]
        %v2348 = vld [vmem:[%s2346 + $0x8] sm:$0xff]
        %v2349 = vld [vmem:[%s2346 + $0x10] sm:$0xff]
        %v2350 = vld [vmem:[%s2346 + $0x18] sm:$0xff]
        %v2351 = vld [vmem:[%s2346 + $0x20] sm:$0xff]
        %v2352 = vld [vmem:[%s2346 + $0x28] sm:$0xff]
        %v2353 = vld [vmem:[%s2346 + $0x30] sm:$0xff]
        %v2354 = vld [vmem:[%s2346 + $0x38] sm:$0xff]
        %v2355 = vld [vmem:[%s2346 + $0x40] sm:$0xff]
        %v2356 = vld [vmem:[%s2346 + $0x48] sm:$0xff]
        %v2357 = vld [vmem:[%s2346 + $0x50] sm:$0xff]
        %v2358 = vld [vmem:[%s2346 + $0x58] sm:$0xff]
        %v2359 = vld [vmem:[%s2346 + $0x60] sm:$0xff]
        %v2360 = vld [vmem:[%s2346 + $0x68] sm:$0xff]
        %v2361 = vld [vmem:[%s2346 + $0x70] sm:$0xff]
        %v2362 = vld [vmem:[%s2346 + $0x78] sm:$0xff]
        %s2363 = scalar_lea.vmem %s3, 5
        %v2364 = vld [vmem:[%s2363] sm:$0x1]
        %v2366 = vperm.slane %v2364, 0
        %2368 = vmatpush.msra.mxu0 %v2362
        %2369 = vmatpush.msra.mxu0 %v2361
        %2370 = vmatpush.msra.mxu0 %v2360
        %2371 = vmatpush.msra.mxu0 %v2359
        %2372 = vmatpush.msra.mxu0 %v2358
        %2373 = vmatpush.msra.mxu0 %v2357
        %2374 = vmatpush.msra.mxu0 %v2356
        %2375 = vmatpush.msra.mxu0 %v2355
        %2376 = vmatpush.msra.mxu0 %v2354
        %2377 = vmatpush.msra.mxu0 %v2353
        %2378 = vmatpush.msra.mxu0 %v2352
        %2379 = vmatpush.msra.mxu0 %v2351
        %2380 = vmatpush.msra.mxu0 %v2350
        %2381 = vmatpush.msra.mxu0 %v2349
        %2382 = vmatpush.msra.mxu0 %v2348
        %2383 = vmatpush.msra.mxu0 %v2347
        %2384 = vmatmul.f32.gmra.mxu0 %v2282
        %v2385 = vpop.f32.mrf.mxu0
        %v2386 = vadd.f32 %v2366, %v2385
        %2387 = vmatmul.f32.gmra.mxu0 %v2283
        %v2388 = vpop.f32.mrf.mxu0
        %v2389 = vadd.f32 %v2366, %v2388
        %2390 = vmatmul.f32.gmra.mxu0 %v2284
        %v2391 = vpop.f32.mrf.mxu0
        %v2392 = vadd.f32 %v2366, %v2391
        %2393 = vmatmul.f32.gmra.mxu0 %v2285
        %v2394 = vpop.f32.mrf.mxu0
        %v2395 = vadd.f32 %v2366, %v2394
        %2396 = vmatmul.f32.gmra.mxu0 %v2286
        %v2397 = vpop.f32.mrf.mxu0
        %v2398 = vadd.f32 %v2366, %v2397
        %2399 = vmatmul.f32.gmra.mxu0 %v2287
        %v2400 = vpop.f32.mrf.mxu0
        %v2401 = vadd.f32 %v2366, %v2400
        %2402 = vmatmul.f32.gmra.mxu0 %v2288
        %v2403 = vpop.f32.mrf.mxu0
        %v2404 = vadd.f32 %v2366, %v2403
        %2405 = vmatmul.f32.gmra.mxu0 %v2289
        %v2406 = vpop.f32.mrf.mxu0
        %v2407 = vadd.f32 %v2366, %v2406
        %2408 = vmatmul.f32.gmra.mxu0 %v2290
        %v2409 = vpop.f32.mrf.mxu0
        %v2410 = vadd.f32 %v2366, %v2409
        %2411 = vmatmul.f32.gmra.mxu0 %v2291
        %v2412 = vpop.f32.mrf.mxu0
        %v2413 = vadd.f32 %v2366, %v2412
        %2414 = vmatmul.f32.gmra.mxu0 %v2292
        %v2415 = vpop.f32.mrf.mxu0
        %v2416 = vadd.f32 %v2366, %v2415
        %2417 = vmatmul.f32.gmra.mxu0 %v2293
        %v2418 = vpop.f32.mrf.mxu0
        %v2419 = vadd.f32 %v2366, %v2418
        %2420 = vmatmul.f32.gmra.mxu0 %v2294
        %v2421 = vpop.f32.mrf.mxu0
        %v2422 = vadd.f32 %v2366, %v2421
        %2423 = vmatmul.f32.gmra.mxu0 %v2295
        %v2424 = vpop.f32.mrf.mxu0
        %v2425 = vadd.f32 %v2366, %v2424
        %2426 = vmatmul.f32.gmra.mxu0 %v2296
        %v2427 = vpop.f32.mrf.mxu0
        %v2428 = vadd.f32 %v2366, %v2427
        %2429 = vmatmul.f32.gmra.mxu0 %v2297
        %v2430 = vpop.f32.mrf.mxu0
        %v2431 = vadd.f32 %v2366, %v2430
        %2432 = vmatmul.f32.gmra.mxu0 %v2298
        %v2433 = vpop.f32.mrf.mxu0
        %v2434 = vadd.f32 %v2366, %v2433
        %2435 = vmatmul.f32.gmra.mxu0 %v2299
        %v2436 = vpop.f32.mrf.mxu0
        %v2437 = vadd.f32 %v2366, %v2436
        %2438 = vmatmul.f32.gmra.mxu0 %v2300
        %v2439 = vpop.f32.mrf.mxu0
        %v2440 = vadd.f32 %v2366, %v2439
        %2441 = vmatmul.f32.gmra.mxu0 %v2301
        %v2442 = vpop.f32.mrf.mxu0
        %v2443 = vadd.f32 %v2366, %v2442
        %2444 = vmatmul.f32.gmra.mxu0 %v2302
        %v2445 = vpop.f32.mrf.mxu0
        %v2446 = vadd.f32 %v2366, %v2445
        %2447 = vmatmul.f32.gmra.mxu0 %v2303
        %v2448 = vpop.f32.mrf.mxu0
        %v2449 = vadd.f32 %v2366, %v2448
        %2450 = vmatmul.f32.gmra.mxu0 %v2304
        %v2451 = vpop.f32.mrf.mxu0
        %v2452 = vadd.f32 %v2366, %v2451
        %2453 = vmatmul.f32.gmra.mxu0 %v2305
        %v2454 = vpop.f32.mrf.mxu0
        %v2455 = vadd.f32 %v2366, %v2454
        %2456 = vmatmul.f32.gmra.mxu0 %v2306
        %v2457 = vpop.f32.mrf.mxu0
        %v2458 = vadd.f32 %v2366, %v2457
        %2459 = vmatmul.f32.gmra.mxu0 %v2307
        %v2460 = vpop.f32.mrf.mxu0
        %v2461 = vadd.f32 %v2366, %v2460
        %2462 = vmatmul.f32.gmra.mxu0 %v2308
        %v2463 = vpop.f32.mrf.mxu0
        %v2464 = vadd.f32 %v2366, %v2463
        %2465 = vmatmul.f32.gmra.mxu0 %v2309
        %v2466 = vpop.f32.mrf.mxu0
        %v2467 = vadd.f32 %v2366, %v2466
        %2468 = vmatmul.f32.gmra.mxu0 %v2310
        %v2469 = vpop.f32.mrf.mxu0
        %v2470 = vadd.f32 %v2366, %v2469
        %2471 = vmatmul.f32.gmra.mxu0 %v2311
        %v2472 = vpop.f32.mrf.mxu0
        %v2473 = vadd.f32 %v2366, %v2472
        %2474 = vmatmul.f32.gmra.mxu0 %v2312
        %v2475 = vpop.f32.mrf.mxu0
        %v2476 = vadd.f32 %v2366, %v2475
        %2477 = vmatmul.f32.gmra.mxu0 %v2313
        %v2478 = vpop.f32.mrf.mxu0
        %v2479 = vadd.f32 %v2366, %v2478
        %2480 = vmatmul.f32.gmra.mxu0 %v2314
        %v2481 = vpop.f32.mrf.mxu0
        %v2482 = vadd.f32 %v2366, %v2481
        %2483 = vmatmul.f32.gmra.mxu0 %v2315
        %v2484 = vpop.f32.mrf.mxu0
        %v2485 = vadd.f32 %v2366, %v2484
        %2486 = vmatmul.f32.gmra.mxu0 %v2316
        %v2487 = vpop.f32.mrf.mxu0
        %v2488 = vadd.f32 %v2366, %v2487
        %2489 = vmatmul.f32.gmra.mxu0 %v2317
        %v2490 = vpop.f32.mrf.mxu0
        %v2491 = vadd.f32 %v2366, %v2490
        %2492 = vmatmul.f32.gmra.mxu0 %v2318
        %v2493 = vpop.f32.mrf.mxu0
        %v2494 = vadd.f32 %v2366, %v2493
        %2495 = vmatmul.f32.gmra.mxu0 %v2319
        %v2496 = vpop.f32.mrf.mxu0
        %v2497 = vadd.f32 %v2366, %v2496
        %2498 = vmatmul.f32.gmra.mxu0 %v2320
        %v2499 = vpop.f32.mrf.mxu0
        %v2500 = vadd.f32 %v2366, %v2499
        %2501 = vmatmul.f32.gmra.mxu0 %v2321
        %v2502 = vpop.f32.mrf.mxu0
        %v2503 = vadd.f32 %v2366, %v2502
        %2504 = vmatmul.f32.gmra.mxu0 %v2322
        %v2505 = vpop.f32.mrf.mxu0
        %v2506 = vadd.f32 %v2366, %v2505
        %2507 = vmatmul.f32.gmra.mxu0 %v2323
        %v2508 = vpop.f32.mrf.mxu0
        %v2509 = vadd.f32 %v2366, %v2508
        %2510 = vmatmul.f32.gmra.mxu0 %v2324
        %v2511 = vpop.f32.mrf.mxu0
        %v2512 = vadd.f32 %v2366, %v2511
        %2513 = vmatmul.f32.gmra.mxu0 %v2325
        %v2514 = vpop.f32.mrf.mxu0
        %v2515 = vadd.f32 %v2366, %v2514
        %2516 = vmatmul.f32.gmra.mxu0 %v2326
        %v2517 = vpop.f32.mrf.mxu0
        %v2518 = vadd.f32 %v2366, %v2517
        %2519 = vmatmul.f32.gmra.mxu0 %v2327
        %v2520 = vpop.f32.mrf.mxu0
        %v2521 = vadd.f32 %v2366, %v2520
        %2522 = vmatmul.f32.gmra.mxu0 %v2328
        %v2523 = vpop.f32.mrf.mxu0
        %v2524 = vadd.f32 %v2366, %v2523
        %2525 = vmatmul.f32.gmra.mxu0 %v2329
        %v2526 = vpop.f32.mrf.mxu0
        %v2527 = vadd.f32 %v2366, %v2526
        %2528 = vmatmul.f32.gmra.mxu0 %v2330
        %v2529 = vpop.f32.mrf.mxu0
        %v2530 = vadd.f32 %v2366, %v2529
        %2531 = vmatmul.f32.gmra.mxu0 %v2331
        %v2532 = vpop.f32.mrf.mxu0
        %v2533 = vadd.f32 %v2366, %v2532
        %2534 = vmatmul.f32.gmra.mxu0 %v2332
        %v2535 = vpop.f32.mrf.mxu0
        %v2536 = vadd.f32 %v2366, %v2535
        %2537 = vmatmul.f32.gmra.mxu0 %v2333
        %v2538 = vpop.f32.mrf.mxu0
        %v2539 = vadd.f32 %v2366, %v2538
        %2540 = vmatmul.f32.gmra.mxu0 %v2334
        %v2541 = vpop.f32.mrf.mxu0
        %v2542 = vadd.f32 %v2366, %v2541
        %2543 = vmatmul.f32.gmra.mxu0 %v2335
        %v2544 = vpop.f32.mrf.mxu0
        %v2545 = vadd.f32 %v2366, %v2544
        %2546 = vmatmul.f32.gmra.mxu0 %v2336
        %v2547 = vpop.f32.mrf.mxu0
        %v2548 = vadd.f32 %v2366, %v2547
        %2549 = vmatmul.f32.gmra.mxu0 %v2337
        %v2550 = vpop.f32.mrf.mxu0
        %v2551 = vadd.f32 %v2366, %v2550
        %2552 = vmatmul.f32.gmra.mxu0 %v2338
        %v2553 = vpop.f32.mrf.mxu0
        %v2554 = vadd.f32 %v2366, %v2553
        %2555 = vmatmul.f32.gmra.mxu0 %v2339
        %v2556 = vpop.f32.mrf.mxu0
        %v2557 = vadd.f32 %v2366, %v2556
        %2558 = vmatmul.f32.gmra.mxu0 %v2340
        %v2559 = vpop.f32.mrf.mxu0
        %v2560 = vadd.f32 %v2366, %v2559
        %2561 = vmatmul.f32.gmra.mxu0 %v2341
        %v2562 = vpop.f32.mrf.mxu0
        %v2563 = vadd.f32 %v2366, %v2562
        %2564 = vmatmul.f32.gmra.mxu0 %v2342
        %v2565 = vpop.f32.mrf.mxu0
        %v2566 = vadd.f32 %v2366, %v2565
        %2567 = vmatmul.f32.gmra.mxu0 %v2343
        %v2568 = vpop.f32.mrf.mxu0
        %v2569 = vadd.f32 %v2366, %v2568
        %2570 = vmatmul.f32.gmra.mxu0 %v2344
        %v2571 = vpop.f32.mrf.mxu0
        %v2572 = vadd.f32 %v2366, %v2571
        %2573 = vmatmul.f32.gmra.mxu0 %v2345
        %v2574 = vpop.f32.mrf.mxu0
        %v2575 = vadd.f32 %v2366, %v2574
        %2576 = vdwg.mxu0
        %2577 = vst [vmem:[%s191] sm:$0xff] %v2386
        %2578 = vst [vmem:[%s191 + $0x8] sm:$0xff] %v2389
        %2579 = vst [vmem:[%s191 + $0x10] sm:$0xff] %v2392
        %2580 = vst [vmem:[%s191 + $0x18] sm:$0xff] %v2395
        %2581 = vst [vmem:[%s191 + $0x20] sm:$0xff] %v2398
        %2582 = vst [vmem:[%s191 + $0x28] sm:$0xff] %v2401
        %2583 = vst [vmem:[%s191 + $0x30] sm:$0xff] %v2404
        %2584 = vst [vmem:[%s191 + $0x38] sm:$0xff] %v2407
        %2585 = vst [vmem:[%s191 + $0x40] sm:$0xff] %v2410
        %2586 = vst [vmem:[%s191 + $0x48] sm:$0xff] %v2413
        %2587 = vst [vmem:[%s191 + $0x50] sm:$0xff] %v2416
        %2588 = vst [vmem:[%s191 + $0x58] sm:$0xff] %v2419
        %2589 = vst [vmem:[%s191 + $0x60] sm:$0xff] %v2422
        %2590 = vst [vmem:[%s191 + $0x68] sm:$0xff] %v2425
        %2591 = vst [vmem:[%s191 + $0x70] sm:$0xff] %v2428
        %2592 = vst [vmem:[%s191 + $0x78] sm:$0xff] %v2431
        %2593 = vst [vmem:[%s191 + $0x80] sm:$0xff] %v2434
        %2594 = vst [vmem:[%s191 + $0x88] sm:$0xff] %v2437
        %2595 = vst [vmem:[%s191 + $0x90] sm:$0xff] %v2440
        %2596 = vst [vmem:[%s191 + $0x98] sm:$0xff] %v2443
        %2597 = vst [vmem:[%s191 + $0xa0] sm:$0xff] %v2446
        %2598 = vst [vmem:[%s191 + $0xa8] sm:$0xff] %v2449
        %2599 = vst [vmem:[%s191 + $0xb0] sm:$0xff] %v2452
        %2600 = vst [vmem:[%s191 + $0xb8] sm:$0xff] %v2455
        %2601 = vst [vmem:[%s191 + $0xc0] sm:$0xff] %v2458
        %2602 = vst [vmem:[%s191 + $0xc8] sm:$0xff] %v2461
        %2603 = vst [vmem:[%s191 + $0xd0] sm:$0xff] %v2464
        %2604 = vst [vmem:[%s191 + $0xd8] sm:$0xff] %v2467
        %2605 = vst [vmem:[%s191 + $0xe0] sm:$0xff] %v2470
        %2606 = vst [vmem:[%s191 + $0xe8] sm:$0xff] %v2473
        %2607 = vst [vmem:[%s191 + $0xf0] sm:$0xff] %v2476
        %2608 = vst [vmem:[%s191 + $0xf8] sm:$0xff] %v2479
        %2609 = vst [vmem:[%s191 + $0x100] sm:$0xff] %v2482
        %2610 = vst [vmem:[%s191 + $0x108] sm:$0xff] %v2485
        %2611 = vst [vmem:[%s191 + $0x110] sm:$0xff] %v2488
        %2612 = vst [vmem:[%s191 + $0x118] sm:$0xff] %v2491
        %2613 = vst [vmem:[%s191 + $0x120] sm:$0xff] %v2494
        %2614 = vst [vmem:[%s191 + $0x128] sm:$0xff] %v2497
        %2615 = vst [vmem:[%s191 + $0x130] sm:$0xff] %v2500
        %2616 = vst [vmem:[%s191 + $0x138] sm:$0xff] %v2503
        %2617 = vst [vmem:[%s191 + $0x140] sm:$0xff] %v2506
        %2618 = vst [vmem:[%s191 + $0x148] sm:$0xff] %v2509
        %2619 = vst [vmem:[%s191 + $0x150] sm:$0xff] %v2512
        %2620 = vst [vmem:[%s191 + $0x158] sm:$0xff] %v2515
        %2621 = vst [vmem:[%s191 + $0x160] sm:$0xff] %v2518
        %2622 = vst [vmem:[%s191 + $0x168] sm:$0xff] %v2521
        %2623 = vst [vmem:[%s191 + $0x170] sm:$0xff] %v2524
        %2624 = vst [vmem:[%s191 + $0x178] sm:$0xff] %v2527
        %2625 = vst [vmem:[%s191 + $0x180] sm:$0xff] %v2530
        %2626 = vst [vmem:[%s191 + $0x188] sm:$0xff] %v2533
        %2627 = vst [vmem:[%s191 + $0x190] sm:$0xff] %v2536
        %2628 = vst [vmem:[%s191 + $0x198] sm:$0xff] %v2539
        %2629 = vst [vmem:[%s191 + $0x1a0] sm:$0xff] %v2542
        %2630 = vst [vmem:[%s191 + $0x1a8] sm:$0xff] %v2545
        %2631 = vst [vmem:[%s191 + $0x1b0] sm:$0xff] %v2548
        %2632 = vst [vmem:[%s191 + $0x1b8] sm:$0xff] %v2551
        %2633 = vst [vmem:[%s191 + $0x1c0] sm:$0xff] %v2554
        %2634 = vst [vmem:[%s191 + $0x1c8] sm:$0xff] %v2557
        %2635 = vst [vmem:[%s191 + $0x1d0] sm:$0xff] %v2560
        %2636 = vst [vmem:[%s191 + $0x1d8] sm:$0xff] %v2563
        %2637 = vst [vmem:[%s191 + $0x1e0] sm:$0xff] %v2566
        %2638 = vst [vmem:[%s191 + $0x1e8] sm:$0xff] %v2569
        %2639 = vst [vmem:[%s191 + $0x1f0] sm:$0xff] %v2572
        %2640 = vst [vmem:[%s191 + $0x1f8] sm:$0xff] %v2575
        %s2641 = sand.u32 %s115, 1
        %s2642 = scalar_lea.sflag [#allocation3], %s2641
        %s2643 = sand.u32 %s115, 1
        %s2644 = smul.addr %s2643, 512
        %s2645 = scalar_lea.vmem [#allocation2], %s2644
        // Predicated region
        $region37: #{tpu_custom_call.1} parent=35 // pred_check
          %p2646 = pneg %p125
        $region38: #{tpu_custom_call.1} parent=35 // pred_check_branch
          %2648 = sbr.rel (%p2646) target = $region40
        $region39: #{tpu_custom_call.1} parent=35 // pred_region
          %s2649 = smul.u32 64, %s18
          %2651 = vsyncadd %s2642, 0
          %s2652 = smul.addr %s2649, 8
          %s2653 = scalar_lea.hbm %s4, %s2652
          %s2654 = sshll.u32 %s2645, 4
          %s2655 = int_to_ptr.vmem [resolvable:$true] %s2654
          %s2656 = sshll.u32 %s2653, 4
          %s2657 = int_to_ptr.hbm [resolvable:$true] %s2656
          %2662 = dma.vmem_to_hbm [thread:$0]  %s2655, 8192, %s2657, %s2642, 128, 128, 8
        $region40: #{tpu_custom_call.1} parent=35 // pred_fallthru
          _
      $region36: #{tpu_custom_call.1} parent=5 // pred_fallthru
        _
      %p2663 = scmp.le.s32.totalorder 2, %s13
      // Predicated region
      $region41: #{tpu_custom_call.1} parent=5 // pred_check
        %p2664 = pneg %p2663
      $region42: #{tpu_custom_call.1} parent=5 // pred_check_branch
        %2666 = sbr.rel (%p2664) target = $region44
      $region43: #{tpu_custom_call.1} parent=5 // pred_region
        %s2667 = ssub.s32 %s13, 2
        // Predicated region
        $region45: #{tpu_custom_call.1} parent=43 // pred_check
          %p2668 = pneg %p131
        $region46: #{tpu_custom_call.1} parent=43 // pred_check_branch
          %2670 = sbr.rel (%p2668) target = $region48
        $region47: #{tpu_custom_call.1} parent=43 // pred_region
          %s2671 = sand.u32 %s116, 1
          %s2672 = scalar_lea.sflag [#allocation3], %s2671
          %s2673 = sand.u32 %s116, 1
          %s2674 = smul.addr %s2673, 512
          %s2675 = scalar_lea.vmem [#allocation2], %s2674
          %2677 = dma.done %s2672, 8192
        $region48: #{tpu_custom_call.1} parent=43 // pred_fallthru
          _
      $region44: #{tpu_custom_call.1} parent=5 // pred_fallthru
        _
    $region6: #{tpu_custom_call.1} parent=1 // loop_footer
      %s17 = sadd.s32 1, %s13
    $region7: #{tpu_custom_call.1} parent=1 // loop_footer_branch
      %12 = sbr.rel target = $region3
    $region8: #{tpu_custom_call.1} parent=1 // loop_exit
      _
    %2678 = vsyncpa [#allocation3], 1
    %s2679 = scalar_lea.sflag [#allocation3], 1
    %2680 = vsyncpa %s2679, 1

</llo_original>
